<compile_context>
chip_gen: v7x
topology: tpu7x:2x2x1
jax: 0.10.0
libtpu: 0.0.40
codegen_flags: <defaults>
</compile_context>

<pallas_src>
import jax
import jax.numpy as jnp
from jax.experimental import pallas as pl
from jax.experimental.pallas import tpu as pltpu

BN_EPS = 1e-5
PAD = 4          # zero-border spatial rows on each side (>= k-1 = 3)
LANES = 128      # per-layer channel padding granularity (one lane width)


def _round_up(x, m):
    return ((x + m - 1) // m) * m


# ----------------------------------------------------------------------------
# Parameter init: mirrors the PyTorch constructor, precomputes per-layer padded
# per-tap weight matrices (bf16) and padded BN params for the fused kernel.
# ----------------------------------------------------------------------------
def init_decoder_params(key, isize, nz, nc, ngf, n_extra_layers=0):
    assert isize % 16 == 0, "isize has to be a multiple of 16"
    cngf, tisize = ngf // 2, 4
    while tisize != isize:
        cngf, tisize = cngf * 2, tisize * 2

    def bn_params(k_, c):
        k1, k2 = jax.random.split(k_)
        return (1.0 + 0.1 * jax.random.normal(k1, (c,), jnp.float32),
                0.1 * jax.random.normal(k2, (c,), jnp.float32))

    def finish(layer):
        W, k = layer["W"], layer["k"]
        cin_pad = _round_up(layer["cin"], LANES)
        cout_pad = _round_up(layer["cout"], LANES)
        layer["cin_pad"], layer["cout_pad"] = cin_pad, cout_pad
        if layer["kind"] == "convt":          # (Cin, Cout, k): tap j -> x @ W[:, :, j]
            taps = [W[:, :, j] for j in range(k)]
        else:                                  # Conv1d (Cout, Cin, k): tap j -> x @ W[:, :, j].T
            taps = [W[:, :, j].T for j in range(k)]
        wt = jnp.zeros((k, cin_pad, cout_pad), jnp.float32)
        for j, t in enumerate(taps):
            wt = wt.at[j, :t.shape[0], :t.shape[1]].set(t)
        layer["w_taps"] = wt.astype(jnp.bfloat16)           # (k, cin_pad, cout_pad)
        if layer["gamma"] is not None:
            layer["gamma_pad"] = (jnp.zeros((1, cout_pad), jnp.float32)
                                  .at[0, :layer["cout"]].set(layer["gamma"]))
            layer["beta_pad"] = (jnp.zeros((1, cout_pad), jnp.float32)
                                 .at[0, :layer["cout"]].set(layer["beta"]))
        return layer

    layers = []
    # initial: ConvTranspose1d(nz, cngf, 4, 1, 0) + BN + ReLU
    key, kw, kb = jax.random.split(key, 3)
    g, b = bn_params(kb, cngf)
    layers.append(finish(dict(kind="convt", k=4, s=1, p=0, act="relu",
                              cin=nz, cout=cngf, lin=1, lout=4,
                              W=0.05 * jax.random.normal(kw, (nz, cngf, 4), jnp.float32),
                              gamma=g, beta=b)))
    lin = 4
    # pyramid: ConvTranspose1d(cngf, cngf // 2, 4, 2, 1) + BN + ReLU
    while lin < isize // 2:
        key, kw, kb = jax.random.split(key, 3)
        g, b = bn_params(kb, cngf // 2)
        layers.append(finish(dict(kind="convt", k=4, s=2, p=1, act="relu",
                                  cin=cngf, cout=cngf // 2, lin=lin, lout=2 * lin,
                                  W=0.05 * jax.random.normal(kw, (cngf, cngf // 2, 4), jnp.float32),
                                  gamma=g, beta=b)))
        cngf, lin = cngf // 2, 2 * lin
    # extra layers: Conv1d(cngf, cngf, 3, 1, 1) + BN + ReLU
    for _ in range(n_extra_layers):
        key, kw, kb = jax.random.split(key, 3)
        g, b = bn_params(kb, cngf)
        layers.append(finish(dict(kind="conv", k=3, s=1, p=1, act="relu",
                                  cin=cngf, cout=cngf, lin=lin, lout=lin,
                                  W=0.05 * jax.random.normal(kw, (cngf, cngf, 3), jnp.float32),
                                  gamma=g, beta=b)))
    # final: ConvTranspose1d(cngf, nc, 4, 2, 1) + Tanh (no BN)
    key, kw = jax.random.split(key)
    layers.append(finish(dict(kind="convt", k=4, s=2, p=1, act="tanh",
                              cin=cngf, cout=nc, lin=lin, lout=2 * lin,
                              W=0.05 * jax.random.normal(kw, (cngf, nc, 4), jnp.float32),
                              gamma=None, beta=None)))
    return layers


# ----------------------------------------------------------------------------
# Fully-fused decoder forward (single pallas_call, no grid)
# ----------------------------------------------------------------------------
def build_decoder_forward(layers, batch, isize):
    B = batch
    metas, pos = [], 1                               # refs[0] is the padded latent
    for lyr in layers:
        is_s2 = lyr["kind"] == "convt" and lyr["s"] == 2
        m = dict(kind="s2" if is_s2 else "s1", lin=lyr["lin"], lout=lyr["lout"],
                 act=lyr["act"], cin_pad=lyr["cin_pad"], cout_pad=lyr["cout_pad"],
                 w_pos=pos)
        pos += 1
        if lyr["act"] == "relu":
            m["g_pos"], m["b_pos"] = pos, pos + 1
            pos += 2
        if not is_s2:
            k, p = lyr["k"], lyr["p"]
            if lyr["kind"] == "convt":               # y[l] = sum_j x[l + p - j] @ W_j
                m["taps"] = [(p - j, j) for j in range(k)]
            else:                                    # y[l] = sum_j x[l + j - p] @ W_j^T
                m["taps"] = [(j - p, j) for j in range(k)]
        metas.append(m)
    n_in = pos
    assert metas[-1]["lout"] == isize

    # Zero-once correctness relies on per-buffer spatial length being monotone
    # non-decreasing (true for this architecture) — assert so a future layer
    # schedule can't silently read stale rows.
    buf_hist, src = {0: [1], 1: []}, 0
    for mm in metas[:-1]:
        dst = 1 - src
        buf_hist[dst].append(mm["lout"])
        src = dst
    for hist in buf_hist.values():
        assert all(a <= b for a, b in zip(hist, hist[1:])), \
            "per-buffer lout must be non-decreasing for zero-once borders"

    nz_pad = metas[0]["cin_pad"]
    nc_pad = metas[-1]["cout_pad"]
    max_l = max(mm["lout"] for mm in metas[:-1])
    rows = _round_up((max_l + 2 * PAD) * B, 16)                 # bf16 sublane tile
    cpad_max = max([mm["cin_pad"] for mm in metas] + [mm["cout_pad"] for mm in metas[:-1]])

    def kernel(*refs):
        out_ref = refs[n_in]
        bufs = [refs[n_in + 1], refs[n_in + 2]]

        # Zero both activation buffers ONCE (borders + never-written rows).
        bufs[0][...] = jnp.zeros_like(bufs[0])
        bufs[1][...] = jnp.zeros_like(bufs[1])
        # Stage the latent (spatial length 1) with a single block store.
        bufs[0][PAD * B:PAD * B + B, 0:nz_pad] = refs[0][...].astype(jnp.bfloat16)

        src = 0
        for li, meta in enumerate(metas):
            in_buf = bufs[src]
            is_last = li == len(metas) - 1
            w_ref = refs[meta["w_pos"]]
            lin, lout = meta["lin"], meta["lout"]
            cin_p, cout_p = meta["cin_pad"], meta["cout_pad"]

            # ---- pre-activation: one matmul per tap, M = lout*B (bf16 in / f32 acc)
            if meta["kind"] == "s1":
                acc = None
                for off, j in meta["taps"]:
                    start = (PAD + off) * B
                    win = in_buf[start:start + lout * B, 0:cin_p]
                    t = jnp.dot(win, w_ref[j], preferred_element_type=jnp.float32)
                    acc = t if acc is None else acc + t
                parts = (acc,)                                   # ((lout*B, cout_p),)
            else:
                # stride-2 k=4 p=1 transposed conv, even/odd output phases:
                #   y[2m]   = x[m] @ W1 + x[m-1] @ W3
                #   y[2m+1] = x[m] @ W2 + x[m+1] @ W0
                xc = in_buf[PAD * B:(PAD + lin) * B, 0:cin_p]
                xm = in_buf[(PAD - 1) * B:(PAD - 1 + lin) * B, 0:cin_p]
                xp = in_buf[(PAD + 1) * B:(PAD + 1 + lin) * B, 0:cin_p]
                even = (jnp.dot(xc, w_ref[1], preferred_element_type=jnp.float32)
                        + jnp.dot(xm, w_ref[3], preferred_element_type=jnp.float32))
                odd = (jnp.dot(xc, w_ref[2], preferred_element_type=jnp.float32)
                       + jnp.dot(xp, w_ref[0], preferred_element_type=jnp.float32))
                parts = (even, odd)                              # each (lin*B, cout_p)

            # ---- fused BatchNorm (training-mode batch stats, f32) + ReLU, or Tanh
            if meta["act"] == "relu":
                gamma = refs[meta["g_pos"]][...]                 # (1, cout_p)
                beta = refs[meta["b_pos"]][...]
                inv_cnt = 1.0 / float(B * lout)
                tot = parts[0].sum(axis=0, keepdims=True)
                for p_ in parts[1:]:
                    tot = tot + p_.sum(axis=0, keepdims=True)
                mean = tot * inv_cnt
                vtot = None
                for p_ in parts:
                    d = p_ - mean
                    s = jnp.sum(d * d, axis=0, keepdims=True)
                    vtot = s if vtot is None else vtot + s
                var = vtot * inv_cnt
                scale = jax.lax.rsqrt(var + BN_EPS) * gamma      # folded (1, cout_p)
                shift = beta - mean * scale
                post = tuple(jnp.maximum(p_ * scale + shift, 0.0) for p_ in parts)
            else:
                post = tuple(jnp.tanh(p_) for p_ in parts)

            # ---- assemble the layer output block in registers, ONE block store ----
            if meta["kind"] == "s1":
                block = post[0]                                  # (lout*B, cout_p)
            else:
                even_p, odd_p = post
                e3 = even_p.reshape(lin, B, cout_p)
                o3 = odd_p.reshape(lin, B, cout_p)
                # row = (2m + phase)*B + b  ==  m*(2B) + phase*B + b
                block = jnp.concatenate([e3, o3], axis=1).reshape(lout * B, cout_p)

            if is_last:
                out_ref[...] = block.astype(out_ref.dtype)
            else:
                dst = 1 - src
                bufs[dst][PAD * B:(PAD + lout) * B, 0:cout_p] = block.astype(jnp.bfloat16)
                src = dst

    flat_params = []
    for lyr in layers:
        flat_params.append(lyr["w_taps"])
        if lyr["act"] == "relu":
            flat_params.extend([lyr["gamma_pad"], lyr["beta_pad"]])

    nz = layers[0]["cin"]
    nc = layers[-1]["cout"]

    # VMEM budget derived from actual (unpipelined) buffer sizes, capped for v7x.
    act_bytes = 2 * rows * cpad_max * 2
    par_bytes = sum(int(a.size) * a.dtype.itemsize for a in flat_params)
    io_bytes = B * nz_pad * 4 + isize * B * nc_pad * 4
    vmem_limit = int(min(max(2 * (act_bytes + par_bytes + io_bytes) + (4 << 20),
                             16 << 20), 64 << 20))

    vmem_spec = pl.BlockSpec(memory_space=pltpu.MemorySpace.VMEM)

    def forward(x):
        # x: (B, nz, 1) NCL latent -> channels-last, lane-padded (B, nz_pad) f32
        xcl = x[:, :, 0].astype(jnp.float32)
        x_pad = jnp.zeros((B, nz_pad), jnp.float32).at[:, :nz].set(xcl)
        flat = [x_pad] + flat_params
        out_pad = pl.pallas_call(
            kernel,
            out_shape=jax.ShapeDtypeStruct((isize * B, nc_pad), jnp.float32),
            in_specs=[vmem_spec] * len(flat),
            out_specs=vmem_spec,
            scratch_shapes=[pltpu.VMEM((rows, cpad_max), jnp.bfloat16),
                            pltpu.VMEM((rows, cpad_max), jnp.bfloat16)],
            compiler_params=pltpu.CompilerParams(vmem_limit_bytes=vmem_limit),
        )(*flat)
        # rows are (l, b) interleaved; slice real channels and return NCL (B, nc, isize)
        out = out_pad.reshape(isize, B, nc_pad)[:, :, :nc]
        return jnp.transpose(out, (1, 2, 0))

    return forward


# ----------------------------------------------------------------------------
# Plain-JAX f32 reference (im2col), used only for a numerical self-check.
# ----------------------------------------------------------------------------
def _convtranspose1d_im2col(x, k, s, p):
    B, Cin, Lin = x.shape
    if s > 1:
        xz = jnp.zeros((B, Cin, (Lin - 1) * s + 1), x.dtype)
        xz = xz.at[:, :, ::s].set(x)
    else:
        xz = x
    pad = k - 1 - p
    xp = jnp.pad(xz, ((0, 0), (0, 0), (pad, pad)))
    Lout = xp.shape[-1] - k + 1
    idx = jnp.arange(Lout)[:, None] + jnp.arange(k)[None, :]
    patches = xp[:, :, idx]
    patches = jnp.transpose(patches, (0, 2, 1, 3)).reshape(B * Lout, Cin * k)
    return patches, Lout


def _conv1d_im2col(x, k, s, p):
    B, Cin, Lin = x.shape
    xp = jnp.pad(x, ((0, 0), (0, 0), (p, p)))
    Lout = (Lin + 2 * p - k) // s + 1
    idx = (jnp.arange(Lout) * s)[:, None] + jnp.arange(k)[None, :]
    patches = xp[:, :, idx]
    patches = jnp.transpose(patches, (0, 2, 1, 3)).reshape(B * Lout, Cin * k)
    return patches, Lout


def _convt_weight_matrix(w_t, k):
    cin, cout, _ = w_t.shape
    wm = jnp.flip(w_t, axis=2)
    wm = jnp.transpose(wm, (0, 2, 1))
    return wm.reshape(cin * k, cout)


def _conv_weight_matrix(w, k):
    cout, cin, _ = w.shape
    return jnp.transpose(w, (1, 2, 0)).reshape(cin * k, cout)


def decoder_forward_reference(x, layers):
    for layer in layers:
        B = x.shape[0]
        if layer["kind"] == "convt":
            patches, Lout = _convtranspose1d_im2col(x, layer["k"], layer["s"], layer["p"])
            wm = _convt_weight_matrix(layer["W"], layer["k"])
        else:
            patches, Lout = _conv1d_im2col(x, layer["k"], layer["s"], layer["p"])
            wm = _conv_weight_matrix(layer["W"], layer["k"])
        y = patches @ wm
        if layer["act"] == "relu":
            m = y.shape[0]
            mean = jnp.sum(y, axis=0, keepdims=True) / m
            d = y - mean
            var = jnp.sum(d * d, axis=0, keepdims=True) / m
            y = d * jax.lax.rsqrt(var + BN_EPS) * layer["gamma"][None, :] + layer["beta"][None, :]
            y = jnp.maximum(y, 0.0)
        else:
            y = jnp.tanh(y)
        cout = wm.shape[1]
        x = jnp.transpose(y.reshape(B, Lout, cout), (0, 2, 1))
    return x


# ----------------------------------------------------------------------------
if __name__ == "__main__":
    # Small-but-consistent config: isize=16, nz=8, nc=4, ngf=8, 1 extra layer.
    isize, nz, nc, ngf, n_extra = 16, 8, 4, 8, 1
    B = 2

    key = jax.random.PRNGKey(0)
    key, kx = jax.random.split(key)
    layers = init_decoder_params(key, isize, nz, nc, ngf, n_extra)

    x = jax.random.normal(kx, (B, nz, 1), jnp.float32)   # latent input, NCL

    fwd = jax.jit(build_decoder_forward(layers, B, isize))
    out = fwd(x)
    jax.block_until_ready(out)

    assert out.shape == (B, nc, isize), out.shape
    assert bool(jnp.all(jnp.isfinite(out)))
    assert bool(jnp.all(jnp.abs(out) <= 1.0 + 1e-6))      # tanh range

    # Numerical self-check vs. a pure-f32 plain-JAX reference of the same module
    # (loose tolerance accounts for bf16 MXU operands / bf16 activation scratch).
    ref = decoder_forward_reference(x, layers)
    max_err = float(jnp.max(jnp.abs(out - ref)))
    assert max_err < 0.15, max_err

    print("KERNEL_OK")
</pallas_src>

<mosaic_0001>
module attributes {stable_mosaic.version = 11 : i64} {
  func.func @kernel(%arg0: memref<2x128xf32, #tpu.memory_space<vmem>>, %arg1: memref<4x128x128xbf16, #tpu.memory_space<vmem>>, %arg2: memref<1x128xf32, #tpu.memory_space<vmem>>, %arg3: memref<1x128xf32, #tpu.memory_space<vmem>>, %arg4: memref<4x128x128xbf16, #tpu.memory_space<vmem>>, %arg5: memref<1x128xf32, #tpu.memory_space<vmem>>, %arg6: memref<1x128xf32, #tpu.memory_space<vmem>>, %arg7: memref<3x128x128xbf16, #tpu.memory_space<vmem>>, %arg8: memref<1x128xf32, #tpu.memory_space<vmem>>, %arg9: memref<1x128xf32, #tpu.memory_space<vmem>>, %arg10: memref<4x128x128xbf16, #tpu.memory_space<vmem>>, %arg11: memref<32x128xf32, #tpu.memory_space<vmem>>, %arg12: memref<32x128xbf16, #tpu.memory_space<vmem>>, %arg13: memref<32x128xbf16, #tpu.memory_space<vmem>>) attributes {dimension_semantics = [], scalar_prefetch = 0 : i64, scratch_operands = 2 : i64, tpu.core_type = #tpu.core_type<tc>} {
    %cst = arith.constant 0.000000e+00 : bf16
    %0 = vector.broadcast %cst : bf16 to vector<32x128xbf16>
    %c0 = arith.constant 0 : index
    %c0_0 = arith.constant 0 : index
    %1 = vector.load %arg12[%c0, %c0_0] : memref<32x128xbf16, #tpu.memory_space<vmem>>, vector<32x128xbf16>
    tpu.vector_store %arg12[%c0, %c0_0], %0 {strides = array<i32>} : memref<32x128xbf16, #tpu.memory_space<vmem>>, vector<32x128xbf16>,
    %cst_1 = arith.constant 0.000000e+00 : bf16
    %2 = vector.broadcast %cst_1 : bf16 to vector<32x128xbf16>
    %c0_2 = arith.constant 0 : index
    %c0_3 = arith.constant 0 : index
    %3 = vector.load %arg13[%c0_2, %c0_3] : memref<32x128xbf16, #tpu.memory_space<vmem>>, vector<32x128xbf16>
    tpu.vector_store %arg13[%c0_2, %c0_3], %2 {strides = array<i32>} : memref<32x128xbf16, #tpu.memory_space<vmem>>, vector<32x128xbf16>,
    %c0_4 = arith.constant 0 : index
    %c0_5 = arith.constant 0 : index
    %4 = vector.load %arg0[%c0_4, %c0_5] : memref<2x128xf32, #tpu.memory_space<vmem>>, vector<2x128xf32>
    %5 = arith.truncf %4 : vector<2x128xf32> to vector<2x128xbf16>
    %c8 = arith.constant 8 : index
    %c0_6 = arith.constant 0 : index
    %6 = vector.load %arg12[%c8, %c0_6] : memref<32x128xbf16, #tpu.memory_space<vmem>>, vector<2x128xbf16>
    tpu.vector_store %arg12[%c8, %c0_6], %5 {strides = array<i32>} : memref<32x128xbf16, #tpu.memory_space<vmem>>, vector<2x128xbf16>,
    %c8_7 = arith.constant 8 : index
    %c0_8 = arith.constant 0 : index
    %7 = vector.load %arg12[%c8_7, %c0_8] : memref<32x128xbf16, #tpu.memory_space<vmem>>, vector<8x128xbf16>
    %c0_9 = arith.constant 0 : index
    %c0_10 = arith.constant 0 : index
    %c0_11 = arith.constant 0 : index
    %8 = vector.load %arg1[%c0_9, %c0_10, %c0_11] : memref<4x128x128xbf16, #tpu.memory_space<vmem>>, vector<1x128x128xbf16>
    %9 = vector.shape_cast %8 : vector<1x128x128xbf16> to vector<128x128xbf16>
    %cst_12 = arith.constant dense<0.000000e+00> : vector<8x128xf32>
    %10 = tpu.matmul %7, %9, %cst_12 {dimension_numbers = #tpu.dot_dimension_numbers<[1], [0], [0], [1], [0, 0, 1, 1], [], []>} : vector<8x128xbf16>, vector<128x128xbf16>, vector<8x128xf32> -> vector<8x128xf32>
    %c6 = arith.constant 6 : index
    %c0_13 = arith.constant 0 : index
    %11 = vector.load %arg12[%c6, %c0_13] : memref<32x128xbf16, #tpu.memory_space<vmem>>, vector<8x128xbf16>
    %c1 = arith.constant 1 : index
    %c0_14 = arith.constant 0 : index
    %c0_15 = arith.constant 0 : index
    %12 = vector.load %arg1[%c1, %c0_14, %c0_15] : memref<4x128x128xbf16, #tpu.memory_space<vmem>>, vector<1x128x128xbf16>
    %13 = vector.shape_cast %12 : vector<1x128x128xbf16> to vector<128x128xbf16>
    %cst_16 = arith.constant dense<0.000000e+00> : vector<8x128xf32>
    %14 = tpu.matmul %11, %13, %cst_16 {dimension_numbers = #tpu.dot_dimension_numbers<[1], [0], [0], [1], [0, 0, 1, 1], [], []>} : vector<8x128xbf16>, vector<128x128xbf16>, vector<8x128xf32> -> vector<8x128xf32>
    %15 = arith.addf %10, %14 : vector<8x128xf32>
    %c4 = arith.constant 4 : index
    %c0_17 = arith.constant 0 : index
    %16 = vector.load %arg12[%c4, %c0_17] : memref<32x128xbf16, #tpu.memory_space<vmem>>, vector<8x128xbf16>
    %c2 = arith.constant 2 : index
    %c0_18 = arith.constant 0 : index
    %c0_19 = arith.constant 0 : index
    %17 = vector.load %arg1[%c2, %c0_18, %c0_19] : memref<4x128x128xbf16, #tpu.memory_space<vmem>>, vector<1x128x128xbf16>
    %18 = vector.shape_cast %17 : vector<1x128x128xbf16> to vector<128x128xbf16>
    %cst_20 = arith.constant dense<0.000000e+00> : vector<8x128xf32>
    %19 = tpu.matmul %16, %18, %cst_20 {dimension_numbers = #tpu.dot_dimension_numbers<[1], [0], [0], [1], [0, 0, 1, 1], [], []>} : vector<8x128xbf16>, vector<128x128xbf16>, vector<8x128xf32> -> vector<8x128xf32>
    %20 = arith.addf %15, %19 : vector<8x128xf32>
    %c2_21 = arith.constant 2 : index
    %c0_22 = arith.constant 0 : index
    %21 = vector.load %arg12[%c2_21, %c0_22] : memref<32x128xbf16, #tpu.memory_space<vmem>>, vector<8x128xbf16>
    %c3 = arith.constant 3 : index
    %c0_23 = arith.constant 0 : index
    %c0_24 = arith.constant 0 : index
    %22 = vector.load %arg1[%c3, %c0_23, %c0_24] : memref<4x128x128xbf16, #tpu.memory_space<vmem>>, vector<1x128x128xbf16>
    %23 = vector.shape_cast %22 : vector<1x128x128xbf16> to vector<128x128xbf16>
    %cst_25 = arith.constant dense<0.000000e+00> : vector<8x128xf32>
    %24 = tpu.matmul %21, %23, %cst_25 {dimension_numbers = #tpu.dot_dimension_numbers<[1], [0], [0], [1], [0, 0, 1, 1], [], []>} : vector<8x128xbf16>, vector<128x128xbf16>, vector<8x128xf32> -> vector<8x128xf32>
    %25 = arith.addf %20, %24 : vector<8x128xf32>
    %c0_26 = arith.constant 0 : index
    %c0_27 = arith.constant 0 : index
    %26 = vector.load %arg2[%c0_26, %c0_27] : memref<1x128xf32, #tpu.memory_space<vmem>>, vector<1x128xf32>
    %c0_28 = arith.constant 0 : index
    %c0_29 = arith.constant 0 : index
    %27 = vector.load %arg3[%c0_28, %c0_29] : memref<1x128xf32, #tpu.memory_space<vmem>>, vector<1x128xf32>
    %cst_30 = arith.constant dense<0.000000e+00> : vector<128xf32>
    %28 = vector.multi_reduction <add>, %25, %cst_30 [0] : vector<8x128xf32> to vector<128xf32>
    %29 = vector.shape_cast %28 : vector<128xf32> to vector<1x128xf32>
    %cst_31 = arith.constant 1.250000e-01 : f32
    %30 = vector.broadcast %cst_31 : f32 to vector<1x128xf32>
    %31 = arith.mulf %29, %30 : vector<1x128xf32>
    %32 = vector.broadcast %31 : vector<1x128xf32> to vector<8x128xf32>
    %33 = arith.subf %25, %32 : vector<8x128xf32>
    %34 = arith.mulf %33, %33 : vector<8x128xf32>
    %cst_32 = arith.constant dense<0.000000e+00> : vector<128xf32>
    %35 = vector.multi_reduction <add>, %34, %cst_32 [0] : vector<8x128xf32> to vector<128xf32>
    %36 = vector.shape_cast %35 : vector<128xf32> to vector<1x128xf32>
    %cst_33 = arith.constant 1.250000e-01 : f32
    %37 = vector.broadcast %cst_33 : f32 to vector<1x128xf32>
    %38 = arith.mulf %36, %37 : vector<1x128xf32>
    %cst_34 = arith.constant 9.99999974E-6 : f32
    %39 = vector.broadcast %cst_34 : f32 to vector<1x128xf32>
    %40 = arith.addf %38, %39 : vector<1x128xf32>
    %41 = math.rsqrt %40 : vector<1x128xf32>
    %42 = arith.mulf %41, %26 : vector<1x128xf32>
    %43 = arith.mulf %31, %42 : vector<1x128xf32>
    %44 = arith.subf %27, %43 : vector<1x128xf32>
    %45 = vector.broadcast %42 : vector<1x128xf32> to vector<8x128xf32>
    %46 = arith.mulf %25, %45 : vector<8x128xf32>
    %47 = vector.broadcast %44 : vector<1x128xf32> to vector<8x128xf32>
    %48 = arith.addf %46, %47 : vector<8x128xf32>
    %cst_35 = arith.constant 0.000000e+00 : f32
    %49 = vector.broadcast %cst_35 : f32 to vector<8x128xf32>
    %50 = arith.maximumf %48, %49 : vector<8x128xf32>
    %51 = arith.truncf %50 : vector<8x128xf32> to vector<8x128xbf16>
    %c8_36 = arith.constant 8 : index
    %c0_37 = arith.constant 0 : index
    %52 = vector.load %arg13[%c8_36, %c0_37] : memref<32x128xbf16, #tpu.memory_space<vmem>>, vector<8x128xbf16>
    tpu.vector_store %arg13[%c8_36, %c0_37], %51 {strides = array<i32>} : memref<32x128xbf16, #tpu.memory_space<vmem>>, vector<8x128xbf16>,
    %c8_38 = arith.constant 8 : index
    %c0_39 = arith.constant 0 : index
    %53 = vector.load %arg13[%c8_38, %c0_39] : memref<32x128xbf16, #tpu.memory_space<vmem>>, vector<8x128xbf16>
    %c6_40 = arith.constant 6 : index
    %c0_41 = arith.constant 0 : index
    %54 = vector.load %arg13[%c6_40, %c0_41] : memref<32x128xbf16, #tpu.memory_space<vmem>>, vector<8x128xbf16>
    %c10 = arith.constant 10 : index
    %c0_42 = arith.constant 0 : index
    %55 = vector.load %arg13[%c10, %c0_42] : memref<32x128xbf16, #tpu.memory_space<vmem>>, vector<8x128xbf16>
    %c1_43 = arith.constant 1 : index
    %c0_44 = arith.constant 0 : index
    %c0_45 = arith.constant 0 : index
    %56 = vector.load %arg4[%c1_43, %c0_44, %c0_45] : memref<4x128x128xbf16, #tpu.memory_space<vmem>>, vector<1x128x128xbf16>
    %57 = vector.shape_cast %56 : vector<1x128x128xbf16> to vector<128x128xbf16>
    %cst_46 = arith.constant dense<0.000000e+00> : vector<8x128xf32>
    %58 = tpu.matmul %53, %57, %cst_46 {dimension_numbers = #tpu.dot_dimension_numbers<[1], [0], [0], [1], [0, 0, 1, 1], [], []>} : vector<8x128xbf16>, vector<128x128xbf16>, vector<8x128xf32> -> vector<8x128xf32>
    %c3_47 = arith.constant 3 : index
    %c0_48 = arith.constant 0 : index
    %c0_49 = arith.constant 0 : index
    %59 = vector.load %arg4[%c3_47, %c0_48, %c0_49] : memref<4x128x128xbf16, #tpu.memory_space<vmem>>, vector<1x128x128xbf16>
    %60 = vector.shape_cast %59 : vector<1x128x128xbf16> to vector<128x128xbf16>
    %cst_50 = arith.constant dense<0.000000e+00> : vector<8x128xf32>
    %61 = tpu.matmul %54, %60, %cst_50 {dimension_numbers = #tpu.dot_dimension_numbers<[1], [0], [0], [1], [0, 0, 1, 1], [], []>} : vector<8x128xbf16>, vector<128x128xbf16>, vector<8x128xf32> -> vector<8x128xf32>
    %62 = arith.addf %58, %61 : vector<8x128xf32>
    %c2_51 = arith.constant 2 : index
    %c0_52 = arith.constant 0 : index
    %c0_53 = arith.constant 0 : index
    %63 = vector.load %arg4[%c2_51, %c0_52, %c0_53] : memref<4x128x128xbf16, #tpu.memory_space<vmem>>, vector<1x128x128xbf16>
    %64 = vector.shape_cast %63 : vector<1x128x128xbf16> to vector<128x128xbf16>
    %cst_54 = arith.constant dense<0.000000e+00> : vector<8x128xf32>
    %65 = tpu.matmul %53, %64, %cst_54 {dimension_numbers = #tpu.dot_dimension_numbers<[1], [0], [0], [1], [0, 0, 1, 1], [], []>} : vector<8x128xbf16>, vector<128x128xbf16>, vector<8x128xf32> -> vector<8x128xf32>
    %c0_55 = arith.constant 0 : index
    %c0_56 = arith.constant 0 : index
    %c0_57 = arith.constant 0 : index
    %66 = vector.load %arg4[%c0_55, %c0_56, %c0_57] : memref<4x128x128xbf16, #tpu.memory_space<vmem>>, vector<1x128x128xbf16>
    %67 = vector.shape_cast %66 : vector<1x128x128xbf16> to vector<128x128xbf16>
    %cst_58 = arith.constant dense<0.000000e+00> : vector<8x128xf32>
    %68 = tpu.matmul %55, %67, %cst_58 {dimension_numbers = #tpu.dot_dimension_numbers<[1], [0], [0], [1], [0, 0, 1, 1], [], []>} : vector<8x128xbf16>, vector<128x128xbf16>, vector<8x128xf32> -> vector<8x128xf32>
    %69 = arith.addf %65, %68 : vector<8x128xf32>
    %c0_59 = arith.constant 0 : index
    %c0_60 = arith.constant 0 : index
    %70 = vector.load %arg5[%c0_59, %c0_60] : memref<1x128xf32, #tpu.memory_space<vmem>>, vector<1x128xf32>
    %c0_61 = arith.constant 0 : index
    %c0_62 = arith.constant 0 : index
    %71 = vector.load %arg6[%c0_61, %c0_62] : memref<1x128xf32, #tpu.memory_space<vmem>>, vector<1x128xf32>
    %cst_63 = arith.constant dense<0.000000e+00> : vector<128xf32>
    %72 = vector.multi_reduction <add>, %62, %cst_63 [0] : vector<8x128xf32> to vector<128xf32>
    %73 = vector.shape_cast %72 : vector<128xf32> to vector<1x128xf32>
    %cst_64 = arith.constant dense<0.000000e+00> : vector<128xf32>
    %74 = vector.multi_reduction <add>, %69, %cst_64 [0] : vector<8x128xf32> to vector<128xf32>
    %75 = vector.shape_cast %74 : vector<128xf32> to vector<1x128xf32>
    %76 = arith.addf %73, %75 : vector<1x128xf32>
    %cst_65 = arith.constant 6.250000e-02 : f32
    %77 = vector.broadcast %cst_65 : f32 to vector<1x128xf32>
    %78 = arith.mulf %76, %77 : vector<1x128xf32>
    %79 = vector.broadcast %78 : vector<1x128xf32> to vector<8x128xf32>
    %80 = arith.subf %62, %79 : vector<8x128xf32>
    %81 = arith.mulf %80, %80 : vector<8x128xf32>
    %cst_66 = arith.constant dense<0.000000e+00> : vector<128xf32>
    %82 = vector.multi_reduction <add>, %81, %cst_66 [0] : vector<8x128xf32> to vector<128xf32>
    %83 = vector.shape_cast %82 : vector<128xf32> to vector<1x128xf32>
    %84 = vector.broadcast %78 : vector<1x128xf32> to vector<8x128xf32>
    %85 = arith.subf %69, %84 : vector<8x128xf32>
    %86 = arith.mulf %85, %85 : vector<8x128xf32>
    %cst_67 = arith.constant dense<0.000000e+00> : vector<128xf32>
    %87 = vector.multi_reduction <add>, %86, %cst_67 [0] : vector<8x128xf32> to vector<128xf32>
    %88 = vector.shape_cast %87 : vector<128xf32> to vector<1x128xf32>
    %89 = arith.addf %83, %88 : vector<1x128xf32>
    %cst_68 = arith.constant 6.250000e-02 : f32
    %90 = vector.broadcast %cst_68 : f32 to vector<1x128xf32>
    %91 = arith.mulf %89, %90 : vector<1x128xf32>
    %cst_69 = arith.constant 9.99999974E-6 : f32
    %92 = vector.broadcast %cst_69 : f32 to vector<1x128xf32>
    %93 = arith.addf %91, %92 : vector<1x128xf32>
    %94 = math.rsqrt %93 : vector<1x128xf32>
    %95 = arith.mulf %94, %70 : vector<1x128xf32>
    %96 = arith.mulf %78, %95 : vector<1x128xf32>
    %97 = arith.subf %71, %96 : vector<1x128xf32>
    %98 = vector.broadcast %95 : vector<1x128xf32> to vector<8x128xf32>
    %99 = arith.mulf %62, %98 : vector<8x128xf32>
    %100 = vector.broadcast %97 : vector<1x128xf32> to vector<8x128xf32>
    %101 = arith.addf %99, %100 : vector<8x128xf32>
    %cst_70 = arith.constant 0.000000e+00 : f32
    %102 = vector.broadcast %cst_70 : f32 to vector<8x128xf32>
    %103 = arith.maximumf %101, %102 : vector<8x128xf32>
    %104 = vector.broadcast %95 : vector<1x128xf32> to vector<8x128xf32>
    %105 = arith.mulf %69, %104 : vector<8x128xf32>
    %106 = vector.broadcast %97 : vector<1x128xf32> to vector<8x128xf32>
    %107 = arith.addf %105, %106 : vector<8x128xf32>
    %cst_71 = arith.constant 0.000000e+00 : f32
    %108 = vector.broadcast %cst_71 : f32 to vector<8x128xf32>
    %109 = arith.maximumf %107, %108 : vector<8x128xf32>
    %110 = vector.shape_cast %103 : vector<8x128xf32> to vector<4x2x128xf32>
    %111 = vector.shape_cast %109 : vector<8x128xf32> to vector<4x2x128xf32>
    %112 = tpu.concatenate %110, %111 in 1 : vector<4x2x128xf32>, vector<4x2x128xf32> -> vector<4x4x128xf32>
    %113 = vector.shape_cast %112 : vector<4x4x128xf32> to vector<16x128xf32>
    %114 = arith.truncf %113 : vector<16x128xf32> to vector<16x128xbf16>
    %c8_72 = arith.constant 8 : index
    %c0_73 = arith.constant 0 : index
    %115 = vector.load %arg12[%c8_72, %c0_73] : memref<32x128xbf16, #tpu.memory_space<vmem>>, vector<16x128xbf16>
    tpu.vector_store %arg12[%c8_72, %c0_73], %114 {strides = array<i32>} : memref<32x128xbf16, #tpu.memory_space<vmem>>, vector<16x128xbf16>,
    %c6_74 = arith.constant 6 : index
    %c0_75 = arith.constant 0 : index
    %116 = vector.load %arg12[%c6_74, %c0_75] : memref<32x128xbf16, #tpu.memory_space<vmem>>, vector<16x128xbf16>
    %c0_76 = arith.constant 0 : index
    %c0_77 = arith.constant 0 : index
    %c0_78 = arith.constant 0 : index
    %117 = vector.load %arg7[%c0_76, %c0_77, %c0_78] : memref<3x128x128xbf16, #tpu.memory_space<vmem>>, vector<1x128x128xbf16>
    %118 = vector.shape_cast %117 : vector<1x128x128xbf16> to vector<128x128xbf16>
    %cst_79 = arith.constant dense<0.000000e+00> : vector<16x128xf32>
    %119 = tpu.matmul %116, %118, %cst_79 {dimension_numbers = #tpu.dot_dimension_numbers<[1], [0], [0], [1], [0, 0, 1, 1], [], []>} : vector<16x128xbf16>, vector<128x128xbf16>, vector<16x128xf32> -> vector<16x128xf32>
    %c8_80 = arith.constant 8 : index
    %c0_81 = arith.constant 0 : index
    %120 = vector.load %arg12[%c8_80, %c0_81] : memref<32x128xbf16, #tpu.memory_space<vmem>>, vector<16x128xbf16>
    %c1_82 = arith.constant 1 : index
    %c0_83 = arith.constant 0 : index
    %c0_84 = arith.constant 0 : index
    %121 = vector.load %arg7[%c1_82, %c0_83, %c0_84] : memref<3x128x128xbf16, #tpu.memory_space<vmem>>, vector<1x128x128xbf16>
    %122 = vector.shape_cast %121 : vector<1x128x128xbf16> to vector<128x128xbf16>
    %cst_85 = arith.constant dense<0.000000e+00> : vector<16x128xf32>
    %123 = tpu.matmul %120, %122, %cst_85 {dimension_numbers = #tpu.dot_dimension_numbers<[1], [0], [0], [1], [0, 0, 1, 1], [], []>} : vector<16x128xbf16>, vector<128x128xbf16>, vector<16x128xf32> -> vector<16x128xf32>
    %124 = arith.addf %119, %123 : vector<16x128xf32>
    %c10_86 = arith.constant 10 : index
    %c0_87 = arith.constant 0 : index
    %125 = vector.load %arg12[%c10_86, %c0_87] : memref<32x128xbf16, #tpu.memory_space<vmem>>, vector<16x128xbf16>
    %c2_88 = arith.constant 2 : index
    %c0_89 = arith.constant 0 : index
    %c0_90 = arith.constant 0 : index
    %126 = vector.load %arg7[%c2_88, %c0_89, %c0_90] : memref<3x128x128xbf16, #tpu.memory_space<vmem>>, vector<1x128x128xbf16>
    %127 = vector.shape_cast %126 : vector<1x128x128xbf16> to vector<128x128xbf16>
    %cst_91 = arith.constant dense<0.000000e+00> : vector<16x128xf32>
    %128 = tpu.matmul %125, %127, %cst_91 {dimension_numbers = #tpu.dot_dimension_numbers<[1], [0], [0], [1], [0, 0, 1, 1], [], []>} : vector<16x128xbf16>, vector<128x128xbf16>, vector<16x128xf32> -> vector<16x128xf32>
    %129 = arith.addf %124, %128 : vector<16x128xf32>
    %c0_92 = arith.constant 0 : index
    %c0_93 = arith.constant 0 : index
    %130 = vector.load %arg8[%c0_92, %c0_93] : memref<1x128xf32, #tpu.memory_space<vmem>>, vector<1x128xf32>
    %c0_94 = arith.constant 0 : index
    %c0_95 = arith.constant 0 : index
    %131 = vector.load %arg9[%c0_94, %c0_95] : memref<1x128xf32, #tpu.memory_space<vmem>>, vector<1x128xf32>
    %cst_96 = arith.constant dense<0.000000e+00> : vector<128xf32>
    %132 = vector.multi_reduction <add>, %129, %cst_96 [0] : vector<16x128xf32> to vector<128xf32>
    %133 = vector.shape_cast %132 : vector<128xf32> to vector<1x128xf32>
    %cst_97 = arith.constant 6.250000e-02 : f32
    %134 = vector.broadcast %cst_97 : f32 to vector<1x128xf32>
    %135 = arith.mulf %133, %134 : vector<1x128xf32>
    %136 = vector.broadcast %135 : vector<1x128xf32> to vector<16x128xf32>
    %137 = arith.subf %129, %136 : vector<16x128xf32>
    %138 = arith.mulf %137, %137 : vector<16x128xf32>
    %cst_98 = arith.constant dense<0.000000e+00> : vector<128xf32>
    %139 = vector.multi_reduction <add>, %138, %cst_98 [0] : vector<16x128xf32> to vector<128xf32>
    %140 = vector.shape_cast %139 : vector<128xf32> to vector<1x128xf32>
    %cst_99 = arith.constant 6.250000e-02 : f32
    %141 = vector.broadcast %cst_99 : f32 to vector<1x128xf32>
    %142 = arith.mulf %140, %141 : vector<1x128xf32>
    %cst_100 = arith.constant 9.99999974E-6 : f32
    %143 = vector.broadcast %cst_100 : f32 to vector<1x128xf32>
    %144 = arith.addf %142, %143 : vector<1x128xf32>
    %145 = math.rsqrt %144 : vector<1x128xf32>
    %146 = arith.mulf %145, %130 : vector<1x128xf32>
    %147 = arith.mulf %135, %146 : vector<1x128xf32>
    %148 = arith.subf %131, %147 : vector<1x128xf32>
    %149 = vector.broadcast %146 : vector<1x128xf32> to vector<16x128xf32>
    %150 = arith.mulf %129, %149 : vector<16x128xf32>
    %151 = vector.broadcast %148 : vector<1x128xf32> to vector<16x128xf32>
    %152 = arith.addf %150, %151 : vector<16x128xf32>
    %cst_101 = arith.constant 0.000000e+00 : f32
    %153 = vector.broadcast %cst_101 : f32 to vector<16x128xf32>
    %154 = arith.maximumf %152, %153 : vector<16x128xf32>
    %155 = arith.truncf %154 : vector<16x128xf32> to vector<16x128xbf16>
    %c8_102 = arith.constant 8 : index
    %c0_103 = arith.constant 0 : index
    %156 = vector.load %arg13[%c8_102, %c0_103] : memref<32x128xbf16, #tpu.memory_space<vmem>>, vector<16x128xbf16>
    tpu.vector_store %arg13[%c8_102, %c0_103], %155 {strides = array<i32>} : memref<32x128xbf16, #tpu.memory_space<vmem>>, vector<16x128xbf16>,
    %c8_104 = arith.constant 8 : index
    %c0_105 = arith.constant 0 : index
    %157 = vector.load %arg13[%c8_104, %c0_105] : memref<32x128xbf16, #tpu.memory_space<vmem>>, vector<16x128xbf16>
    %c6_106 = arith.constant 6 : index
    %c0_107 = arith.constant 0 : index
    %158 = vector.load %arg13[%c6_106, %c0_107] : memref<32x128xbf16, #tpu.memory_space<vmem>>, vector<16x128xbf16>
    %c10_108 = arith.constant 10 : index
    %c0_109 = arith.constant 0 : index
    %159 = vector.load %arg13[%c10_108, %c0_109] : memref<32x128xbf16, #tpu.memory_space<vmem>>, vector<16x128xbf16>
    %c1_110 = arith.constant 1 : index
    %c0_111 = arith.constant 0 : index
    %c0_112 = arith.constant 0 : index
    %160 = vector.load %arg10[%c1_110, %c0_111, %c0_112] : memref<4x128x128xbf16, #tpu.memory_space<vmem>>, vector<1x128x128xbf16>
    %161 = vector.shape_cast %160 : vector<1x128x128xbf16> to vector<128x128xbf16>
    %cst_113 = arith.constant dense<0.000000e+00> : vector<16x128xf32>
    %162 = tpu.matmul %157, %161, %cst_113 {dimension_numbers = #tpu.dot_dimension_numbers<[1], [0], [0], [1], [0, 0, 1, 1], [], []>} : vector<16x128xbf16>, vector<128x128xbf16>, vector<16x128xf32> -> vector<16x128xf32>
    %c3_114 = arith.constant 3 : index
    %c0_115 = arith.constant 0 : index
    %c0_116 = arith.constant 0 : index
    %163 = vector.load %arg10[%c3_114, %c0_115, %c0_116] : memref<4x128x128xbf16, #tpu.memory_space<vmem>>, vector<1x128x128xbf16>
    %164 = vector.shape_cast %163 : vector<1x128x128xbf16> to vector<128x128xbf16>
    %cst_117 = arith.constant dense<0.000000e+00> : vector<16x128xf32>
    %165 = tpu.matmul %158, %164, %cst_117 {dimension_numbers = #tpu.dot_dimension_numbers<[1], [0], [0], [1], [0, 0, 1, 1], [], []>} : vector<16x128xbf16>, vector<128x128xbf16>, vector<16x128xf32> -> vector<16x128xf32>
    %166 = arith.addf %162, %165 : vector<16x128xf32>
    %c2_118 = arith.constant 2 : index
    %c0_119 = arith.constant 0 : index
    %c0_120 = arith.constant 0 : index
    %167 = vector.load %arg10[%c2_118, %c0_119, %c0_120] : memref<4x128x128xbf16, #tpu.memory_space<vmem>>, vector<1x128x128xbf16>
    %168 = vector.shape_cast %167 : vector<1x128x128xbf16> to vector<128x128xbf16>
    %cst_121 = arith.constant dense<0.000000e+00> : vector<16x128xf32>
    %169 = tpu.matmul %157, %168, %cst_121 {dimension_numbers = #tpu.dot_dimension_numbers<[1], [0], [0], [1], [0, 0, 1, 1], [], []>} : vector<16x128xbf16>, vector<128x128xbf16>, vector<16x128xf32> -> vector<16x128xf32>
    %c0_122 = arith.constant 0 : index
    %c0_123 = arith.constant 0 : index
    %c0_124 = arith.constant 0 : index
    %170 = vector.load %arg10[%c0_122, %c0_123, %c0_124] : memref<4x128x128xbf16, #tpu.memory_space<vmem>>, vector<1x128x128xbf16>
    %171 = vector.shape_cast %170 : vector<1x128x128xbf16> to vector<128x128xbf16>
    %cst_125 = arith.constant dense<0.000000e+00> : vector<16x128xf32>
    %172 = tpu.matmul %159, %171, %cst_125 {dimension_numbers = #tpu.dot_dimension_numbers<[1], [0], [0], [1], [0, 0, 1, 1], [], []>} : vector<16x128xbf16>, vector<128x128xbf16>, vector<16x128xf32> -> vector<16x128xf32>
    %173 = arith.addf %169, %172 : vector<16x128xf32>
    %174 = math.tanh %166 : vector<16x128xf32>
    %175 = math.tanh %173 : vector<16x128xf32>
    %176 = vector.shape_cast %174 : vector<16x128xf32> to vector<8x2x128xf32>
    %177 = vector.shape_cast %175 : vector<16x128xf32> to vector<8x2x128xf32>
    %178 = tpu.concatenate %176, %177 in 1 : vector<8x2x128xf32>, vector<8x2x128xf32> -> vector<8x4x128xf32>
    %179 = vector.shape_cast %178 : vector<8x4x128xf32> to vector<32x128xf32>
    %c0_126 = arith.constant 0 : index
    %c0_127 = arith.constant 0 : index
    %180 = vector.load %arg11[%c0_126, %c0_127] : memref<32x128xf32, #tpu.memory_space<vmem>>, vector<32x128xf32>
    tpu.vector_store %arg11[%c0_126, %c0_127], %179 {strides = array<i32>} : memref<32x128xf32, #tpu.memory_space<vmem>>, vector<32x128xf32>,
    return
  }
}

</mosaic_0001>

<llo_original>
// kernel: forward.1
$region0: #{forward.1}
  #allocation0 [shape = 'u32[]', space=smem, size = 0x4, offset = 0x4, fixed_abs, tag = 'smem constant byte address 0x4 - core index']
  #allocation1 [shape = 'u32[144,128]{1,0:T(1,128)}', space=vmem, size = 0x12000, scoped, tag = 'internal scratch']
  #allocation2 [shape = 'bf16[32,128]{1,0:T(16,128)(2,1)}', space=vmem, size = 0x2000, scoped, tag = 'scratch operand']
  #allocation3 [shape = 'bf16[32,128]{1,0:T(16,128)(2,1)}', space=vmem, size = 0x2000, scoped, tag = 'scratch operand']
  %s0 = inlined_call_operand.vmem [shape: f32[2,128], index: 0, kind: input, shape index: {}]
  %s1 = inlined_call_operand.hbm [shape: bf16[4,128,128], index: 1, kind: input, shape index: {}]
  %s2 = inlined_call_operand.vmem [shape: f32[1,128], index: 2, kind: input, shape index: {}]
  %s3 = inlined_call_operand.vmem [shape: f32[1,128], index: 3, kind: input, shape index: {}]
  %s4 = inlined_call_operand.hbm [shape: bf16[4,128,128], index: 4, kind: input, shape index: {}]
  %s5 = inlined_call_operand.vmem [shape: f32[1,128], index: 5, kind: input, shape index: {}]
  %s6 = inlined_call_operand.vmem [shape: f32[1,128], index: 6, kind: input, shape index: {}]
  %s7 = inlined_call_operand.hbm [shape: bf16[3,128,128], index: 7, kind: input, shape index: {}]
  %s8 = inlined_call_operand.vmem [shape: f32[1,128], index: 8, kind: input, shape index: {}]
  %s9 = inlined_call_operand.vmem [shape: f32[1,128], index: 9, kind: input, shape index: {}]
  %s10 = inlined_call_operand.hbm [shape: bf16[4,128,128], index: 10, kind: input, shape index: {}]
  %s11 = inlined_call_operand.vmem [shape: f32[32,128], index: 11, kind: output, shape index: {}]
  %s12 = sld [smem:[#allocation0]]
  $region70: #{forward.1} parent=0
    _
  %s14 = ssub.s32 1, %s12
  %s15 = scalar_select 0, %s14, %s12
  $region1: #{forward.1} parent=0
    #allocation4 [shape = 'u8[131072]{0}', space=vmem, size = 0x20000, scoped, tag = 'input window, operand 1, single buffered']
    #allocation5 [shape = 's32[1]{0}', space=sflag, size = 0x4, scoped, tag = 'scoped memory for forward.1']
    #allocation6 [shape = 'u8[131072]{0}', space=vmem, size = 0x20000, scoped, tag = 'input window, operand 4, single buffered']
    #allocation7 [shape = 's32[1]{0}', space=sflag, size = 0x4, scoped, tag = 'scoped memory for forward.1']
    #allocation8 [shape = 'u8[98304]{0}', space=vmem, size = 0x18000, scoped, tag = 'input window, operand 7, single buffered']
    #allocation9 [shape = 'u8[131072]{0}', space=vmem, size = 0x20000, scoped, tag = 'input window, operand 10, single buffered']
    #allocation10 [shape = 's32[1]{0}', space=sflag, size = 0x4, scoped, tag = 'scoped memory for forward.1']
    %16 = vsyncpa [#allocation5], 0
    %17 = vsyncpa [#allocation7], 0
    %18 = vsyncpa [#allocation10], 0
    // Predicated region
    $region2: #{forward.1} parent=1 // pred_check
      _
    $region3: #{forward.1} parent=1 // pred_check_branch
      %20 = sbr.rel (0) target = $region5
    $region4: #{forward.1} parent=1 // pred_region
      _
    $region5: #{forward.1} parent=1 // pred_fallthru
      _
    // Predicated region
    $region6: #{forward.1} parent=1 // pred_check
      _
    $region7: #{forward.1} parent=1 // pred_check_branch
      %22 = sbr.rel (0) target = $region9
    $region8: #{forward.1} parent=1 // pred_region
      %s24 = ssub.s32 4096, 4096
      %25 = vsyncadd [#allocation5], %s24
      %s26 = sshll.u32 [#allocation4], 4
      %s27 = int_to_ptr.vmem [resolvable:$true] %s26
      %32 = dma.hbm_to_vmem [thread:$0]  %s1, 4096, %s27, [#allocation5], 64, 64, 4
    $region9: #{forward.1} parent=1 // pred_fallthru
      _
    // Predicated region
    $region10: #{forward.1} parent=1 // pred_check
      _
    $region11: #{forward.1} parent=1 // pred_check_branch
      %34 = sbr.rel (0) target = $region13
    $region12: #{forward.1} parent=1 // pred_region
      _
    $region13: #{forward.1} parent=1 // pred_fallthru
      _
    // Predicated region
    $region14: #{forward.1} parent=1 // pred_check
      _
    $region15: #{forward.1} parent=1 // pred_check_branch
      %36 = sbr.rel (0) target = $region17
    $region16: #{forward.1} parent=1 // pred_region
      _
    $region17: #{forward.1} parent=1 // pred_fallthru
      _
    // Predicated region
    $region18: #{forward.1} parent=1 // pred_check
      _
    $region19: #{forward.1} parent=1 // pred_check_branch
      %38 = sbr.rel (0) target = $region21
    $region20: #{forward.1} parent=1 // pred_region
      %s40 = ssub.s32 4096, 4096
      %41 = vsyncadd [#allocation7], %s40
      %s42 = sshll.u32 [#allocation6], 4
      %s43 = int_to_ptr.vmem [resolvable:$true] %s42
      %48 = dma.hbm_to_vmem [thread:$0]  %s4, 4096, %s43, [#allocation7], 64, 64, 4
    $region21: #{forward.1} parent=1 // pred_fallthru
      _
    // Predicated region
    $region22: #{forward.1} parent=1 // pred_check
      _
    $region23: #{forward.1} parent=1 // pred_check_branch
      %50 = sbr.rel (0) target = $region25
    $region24: #{forward.1} parent=1 // pred_region
      _
    $region25: #{forward.1} parent=1 // pred_fallthru
      _
    // Predicated region
    $region26: #{forward.1} parent=1 // pred_check
      _
    $region27: #{forward.1} parent=1 // pred_check_branch
      %52 = sbr.rel (0) target = $region29
    $region28: #{forward.1} parent=1 // pred_region
      _
    $region29: #{forward.1} parent=1 // pred_fallthru
      _
    // Predicated region
    $region30: #{forward.1} parent=1 // pred_check
      _
    $region31: #{forward.1} parent=1 // pred_check_branch
      %54 = sbr.rel (0) target = $region33
    $region32: #{forward.1} parent=1 // pred_region
      %s56 = ssub.s32 3072, 3072
      %57 = vsyncadd [#allocation7], %s56
      %s58 = sshll.u32 [#allocation8], 4
      %s59 = int_to_ptr.vmem [resolvable:$true] %s58
      %64 = dma.hbm_to_vmem [thread:$0]  %s7, 3072, %s59, [#allocation7], 64, 64, 4
    $region33: #{forward.1} parent=1 // pred_fallthru
      _
    // Predicated region
    $region34: #{forward.1} parent=1 // pred_check
      _
    $region35: #{forward.1} parent=1 // pred_check_branch
      %66 = sbr.rel (0) target = $region37
    $region36: #{forward.1} parent=1 // pred_region
      _
    $region37: #{forward.1} parent=1 // pred_fallthru
      _
    // Predicated region
    $region38: #{forward.1} parent=1 // pred_check
      _
    $region39: #{forward.1} parent=1 // pred_check_branch
      %68 = sbr.rel (0) target = $region41
    $region40: #{forward.1} parent=1 // pred_region
      _
    $region41: #{forward.1} parent=1 // pred_fallthru
      _
    // Predicated region
    $region42: #{forward.1} parent=1 // pred_check
      _
    $region43: #{forward.1} parent=1 // pred_check_branch
      %70 = sbr.rel (0) target = $region45
    $region44: #{forward.1} parent=1 // pred_region
      %s72 = ssub.s32 4096, 4096
      %73 = vsyncadd [#allocation10], %s72
      %s74 = sshll.u32 [#allocation9], 4
      %s75 = int_to_ptr.vmem [resolvable:$true] %s74
      %80 = dma.hbm_to_vmem [thread:$0]  %s10, 4096, %s75, [#allocation10], 64, 64, 4
    $region45: #{forward.1} parent=1 // pred_fallthru
      _
    // Predicated region
    $region46: #{forward.1} parent=1 // pred_check
      _
    $region47: #{forward.1} parent=1 // pred_check_branch
      %82 = sbr.rel (0) target = $region49
    $region48: #{forward.1} parent=1 // pred_region
      %83 = dma.done [#allocation5], 4096
    $region49: #{forward.1} parent=1 // pred_fallthru
      _
    // Predicated region
    $region50: #{forward.1} parent=1 // pred_check
      _
    $region51: #{forward.1} parent=1 // pred_check_branch
      %85 = sbr.rel (0) target = $region53
    $region52: #{forward.1} parent=1 // pred_region
      %86 = dma.done [#allocation7], 4096
    $region53: #{forward.1} parent=1 // pred_fallthru
      _
    // Predicated region
    $region54: #{forward.1} parent=1 // pred_check
      _
    $region55: #{forward.1} parent=1 // pred_check_branch
      %88 = sbr.rel (0) target = $region57
    $region56: #{forward.1} parent=1 // pred_region
      %89 = dma.done [#allocation7], 3072
    $region57: #{forward.1} parent=1 // pred_fallthru
      _
    // Predicated region
    $region58: #{forward.1} parent=1 // pred_check
      _
    $region59: #{forward.1} parent=1 // pred_check_branch
      %91 = sbr.rel (0) target = $region61
    $region60: #{forward.1} parent=1 // pred_region
      %92 = dma.done [#allocation10], 4096
    $region61: #{forward.1} parent=1 // pred_fallthru
      _
    %94 = vst [vmem:[#allocation2] sm:$0xff] 0
    %95 = vst [vmem:[#allocation2 + $0x8] sm:$0xff] 0
    %96 = vst [vmem:[#allocation3] sm:$0xff] 0
    %97 = vst [vmem:[#allocation3 + $0x8] sm:$0xff] 0
    %v98 = vld [vmem:[%s0] sm:$0x3]
    %v99 = vpack.c.bf16 %v98, %v98
    %v101 = vrot.slane %v99, 4
    %103 = vst [vmem:[#allocation2] sm:$0x10] %v101
    %v104 = vld [vmem:[#allocation2] sm:$0xf0]
    %v105 = vld [vmem:[#allocation4] sm:$0xf]
    %v106 = vld [vmem:[#allocation4 + $0x4] sm:$0xf]
    %v107 = vld [vmem:[#allocation4 + $0x8] sm:$0xf]
    %v108 = vld [vmem:[#allocation4 + $0xc] sm:$0xf]
    %v109 = vld [vmem:[#allocation4 + $0x10] sm:$0xf]
    %v110 = vld [vmem:[#allocation4 + $0x14] sm:$0xf]
    %v111 = vld [vmem:[#allocation4 + $0x18] sm:$0xf]
    %v112 = vld [vmem:[#allocation4 + $0x1c] sm:$0xf]
    %v113 = vld [vmem:[#allocation4 + $0x20] sm:$0xf]
    %v114 = vld [vmem:[#allocation4 + $0x24] sm:$0xf]
    %v115 = vld [vmem:[#allocation4 + $0x28] sm:$0xf]
    %v116 = vld [vmem:[#allocation4 + $0x2c] sm:$0xf]
    %v117 = vld [vmem:[#allocation4 + $0x30] sm:$0xf]
    %v118 = vld [vmem:[#allocation4 + $0x34] sm:$0xf]
    %v119 = vld [vmem:[#allocation4 + $0x38] sm:$0xf]
    %v120 = vld [vmem:[#allocation4 + $0x3c] sm:$0xf]
    %v121 = vld [vmem:[#allocation2] sm:$0x78]
    %s122 = scalar_lea.vmem [#allocation4], 64
    %v123 = vld [vmem:[%s122] sm:$0xf]
    %v124 = vld [vmem:[%s122 + $0x4] sm:$0xf]
    %v125 = vld [vmem:[%s122 + $0x8] sm:$0xf]
    %v126 = vld [vmem:[%s122 + $0xc] sm:$0xf]
    %v127 = vld [vmem:[%s122 + $0x10] sm:$0xf]
    %v128 = vld [vmem:[%s122 + $0x14] sm:$0xf]
    %v129 = vld [vmem:[%s122 + $0x18] sm:$0xf]
    %v130 = vld [vmem:[%s122 + $0x1c] sm:$0xf]
    %v131 = vld [vmem:[%s122 + $0x20] sm:$0xf]
    %v132 = vld [vmem:[%s122 + $0x24] sm:$0xf]
    %v133 = vld [vmem:[%s122 + $0x28] sm:$0xf]
    %v134 = vld [vmem:[%s122 + $0x2c] sm:$0xf]
    %v135 = vld [vmem:[%s122 + $0x30] sm:$0xf]
    %v136 = vld [vmem:[%s122 + $0x34] sm:$0xf]
    %v137 = vld [vmem:[%s122 + $0x38] sm:$0xf]
    %v138 = vld [vmem:[%s122 + $0x3c] sm:$0xf]
    %v140 = vrot.slane %v121, 3
    %v158 = vunpack.c.l.b16 %v123
    %v159 = vunpack.c.l.b16 %v124
    %v160 = vunpack.c.l.b16 %v125
    %v161 = vunpack.c.l.b16 %v126
    %v162 = vunpack.c.l.b16 %v127
    %v163 = vunpack.c.l.b16 %v128
    %v164 = vunpack.c.l.b16 %v129
    %v165 = vunpack.c.l.b16 %v130
    %v166 = vunpack.c.l.b16 %v131
    %v167 = vunpack.c.l.b16 %v132
    %v168 = vunpack.c.l.b16 %v133
    %v169 = vunpack.c.l.b16 %v134
    %v170 = vunpack.c.l.b16 %v135
    %v171 = vunpack.c.l.b16 %v136
    %v172 = vunpack.c.l.b16 %v137
    %v173 = vunpack.c.l.b16 %v138
    %v174 = vpack.c.b16 %v159, %v158
    %v175 = vpack.c.b16 %v161, %v160
    %v176 = vpack.c.b16 %v163, %v162
    %v177 = vpack.c.b16 %v165, %v164
    %v178 = vpack.c.b16 %v167, %v166
    %v179 = vpack.c.b16 %v169, %v168
    %v180 = vpack.c.b16 %v171, %v170
    %v181 = vpack.c.b16 %v173, %v172
    %190 = vmatprep.subr.bf16.mxu0 0
    %191 = vmatpush1.bf16.msra.mxu0 %v174
    %192 = vmatprep.subr.bf16.mxu0 0
    %193 = vmatpush1.bf16.msra.mxu0 %v175
    %194 = vmatprep.subr.bf16.mxu0 0
    %195 = vmatpush1.bf16.msra.mxu0 %v176
    %196 = vmatprep.subr.bf16.mxu0 0
    %197 = vmatpush1.bf16.msra.mxu0 %v177
    %198 = vmatprep.subr.bf16.mxu0 0
    %199 = vmatpush1.bf16.msra.mxu0 %v178
    %200 = vmatprep.subr.bf16.mxu0 0
    %201 = vmatpush1.bf16.msra.mxu0 %v179
    %202 = vmatprep.subr.bf16.mxu0 0
    %203 = vmatpush1.bf16.msra.mxu0 %v180
    %204 = vmatprep.subr.bf16.mxu0 0
    %205 = vmatpush1.bf16.msra.mxu0 %v181
    %206 = vmatprep.subr.bf16.mxu0 0
    %207 = vmatpush1.bf16.msra.mxu0 0
    %208 = vmatprep.subr.bf16.mxu0 0
    %209 = vmatpush1.bf16.msra.mxu0 0
    %210 = vmatprep.subr.bf16.mxu0 0
    %211 = vmatpush1.bf16.msra.mxu0 0
    %212 = vmatprep.subr.bf16.mxu0 0
    %213 = vmatpush1.bf16.msra.mxu0 0
    %214 = vmatprep.subr.bf16.mxu0 0
    %215 = vmatpush1.bf16.msra.mxu0 0
    %216 = vmatprep.subr.bf16.mxu0 0
    %217 = vmatpush1.bf16.msra.mxu0 0
    %218 = vmatprep.subr.bf16.mxu0 0
    %219 = vmatpush1.bf16.msra.mxu0 0
    %220 = vmatprep.subr.bf16.mxu0 0
    %221 = vmatpush1.bf16.msra.mxu0 0
    %222 = vmatprep.mubr.bf16.mxu0 0
    %223 = vmatmul.mubr.bf16.gmra.mrb[0].mxu0 %v140
    %v224 = vpop.f32.mrb[0].mxu0
    %v225 = vadd.f32 0.0, %v224
    %v226 = vpop.f32.mrb[0].mxu0
    %v227 = vpop.f32.mrb[0].mxu0
    %v228 = vpop.f32.mrb[0].mxu0
    %229 = vdwg.mxu0
    %v231 = vrot.slane %v104, 4
    %v249 = vunpack.c.l.b16 %v105
    %v250 = vunpack.c.l.b16 %v106
    %v251 = vunpack.c.l.b16 %v107
    %v252 = vunpack.c.l.b16 %v108
    %v253 = vunpack.c.l.b16 %v109
    %v254 = vunpack.c.l.b16 %v110
    %v255 = vunpack.c.l.b16 %v111
    %v256 = vunpack.c.l.b16 %v112
    %v257 = vunpack.c.l.b16 %v113
    %v258 = vunpack.c.l.b16 %v114
    %v259 = vunpack.c.l.b16 %v115
    %v260 = vunpack.c.l.b16 %v116
    %v261 = vunpack.c.l.b16 %v117
    %v262 = vunpack.c.l.b16 %v118
    %v263 = vunpack.c.l.b16 %v119
    %v264 = vunpack.c.l.b16 %v120
    %v265 = vpack.c.b16 %v250, %v249
    %v266 = vpack.c.b16 %v252, %v251
    %v267 = vpack.c.b16 %v254, %v253
    %v268 = vpack.c.b16 %v256, %v255
    %v269 = vpack.c.b16 %v258, %v257
    %v270 = vpack.c.b16 %v260, %v259
    %v271 = vpack.c.b16 %v262, %v261
    %v272 = vpack.c.b16 %v264, %v263
    %281 = vmatprep.subr.bf16.mxu0 0
    %282 = vmatpush1.bf16.msra.mxu0 %v265
    %283 = vmatprep.subr.bf16.mxu0 0
    %284 = vmatpush1.bf16.msra.mxu0 %v266
    %285 = vmatprep.subr.bf16.mxu0 0
    %286 = vmatpush1.bf16.msra.mxu0 %v267
    %287 = vmatprep.subr.bf16.mxu0 0
    %288 = vmatpush1.bf16.msra.mxu0 %v268
    %289 = vmatprep.subr.bf16.mxu0 0
    %290 = vmatpush1.bf16.msra.mxu0 %v269
    %291 = vmatprep.subr.bf16.mxu0 0
    %292 = vmatpush1.bf16.msra.mxu0 %v270
    %293 = vmatprep.subr.bf16.mxu0 0
    %294 = vmatpush1.bf16.msra.mxu0 %v271
    %295 = vmatprep.subr.bf16.mxu0 0
    %296 = vmatpush1.bf16.msra.mxu0 %v272
    %297 = vmatprep.subr.bf16.mxu0 0
    %298 = vmatpush1.bf16.msra.mxu0 0
    %299 = vmatprep.subr.bf16.mxu0 0
    %300 = vmatpush1.bf16.msra.mxu0 0
    %301 = vmatprep.subr.bf16.mxu0 0
    %302 = vmatpush1.bf16.msra.mxu0 0
    %303 = vmatprep.subr.bf16.mxu0 0
    %304 = vmatpush1.bf16.msra.mxu0 0
    %305 = vmatprep.subr.bf16.mxu0 0
    %306 = vmatpush1.bf16.msra.mxu0 0
    %307 = vmatprep.subr.bf16.mxu0 0
    %308 = vmatpush1.bf16.msra.mxu0 0
    %309 = vmatprep.subr.bf16.mxu0 0
    %310 = vmatpush1.bf16.msra.mxu0 0
    %311 = vmatprep.subr.bf16.mxu0 0
    %312 = vmatpush1.bf16.msra.mxu0 0
    %313 = vmatprep.mubr.bf16.mxu0 0
    %314 = vmatmul.mubr.bf16.gmra.mrb[0].mxu0 %v231
    %v315 = vpop.f32.mrb[0].mxu0
    %v316 = vadd.f32 %v225, %v315
    %v317 = vpop.f32.mrb[0].mxu0
    %v318 = vpop.f32.mrb[0].mxu0
    %v319 = vpop.f32.mrb[0].mxu0
    %320 = vdwg.mxu0
    %v321 = vld [vmem:[#allocation2] sm:$0x3c]
    %s322 = scalar_lea.vmem [#allocation4], 128
    %v323 = vld [vmem:[%s322] sm:$0xf]
    %v324 = vld [vmem:[%s322 + $0x4] sm:$0xf]
    %v325 = vld [vmem:[%s322 + $0x8] sm:$0xf]
    %v326 = vld [vmem:[%s322 + $0xc] sm:$0xf]
    %v327 = vld [vmem:[%s322 + $0x10] sm:$0xf]
    %v328 = vld [vmem:[%s322 + $0x14] sm:$0xf]
    %v329 = vld [vmem:[%s322 + $0x18] sm:$0xf]
    %v330 = vld [vmem:[%s322 + $0x1c] sm:$0xf]
    %v331 = vld [vmem:[%s322 + $0x20] sm:$0xf]
    %v332 = vld [vmem:[%s322 + $0x24] sm:$0xf]
    %v333 = vld [vmem:[%s322 + $0x28] sm:$0xf]
    %v334 = vld [vmem:[%s322 + $0x2c] sm:$0xf]
    %v335 = vld [vmem:[%s322 + $0x30] sm:$0xf]
    %v336 = vld [vmem:[%s322 + $0x34] sm:$0xf]
    %v337 = vld [vmem:[%s322 + $0x38] sm:$0xf]
    %v338 = vld [vmem:[%s322 + $0x3c] sm:$0xf]
    %v340 = vrot.slane %v321, 2
    %v358 = vunpack.c.l.b16 %v323
    %v359 = vunpack.c.l.b16 %v324
    %v360 = vunpack.c.l.b16 %v325
    %v361 = vunpack.c.l.b16 %v326
    %v362 = vunpack.c.l.b16 %v327
    %v363 = vunpack.c.l.b16 %v328
    %v364 = vunpack.c.l.b16 %v329
    %v365 = vunpack.c.l.b16 %v330
    %v366 = vunpack.c.l.b16 %v331
    %v367 = vunpack.c.l.b16 %v332
    %v368 = vunpack.c.l.b16 %v333
    %v369 = vunpack.c.l.b16 %v334
    %v370 = vunpack.c.l.b16 %v335
    %v371 = vunpack.c.l.b16 %v336
    %v372 = vunpack.c.l.b16 %v337
    %v373 = vunpack.c.l.b16 %v338
    %v374 = vpack.c.b16 %v359, %v358
    %v375 = vpack.c.b16 %v361, %v360
    %v376 = vpack.c.b16 %v363, %v362
    %v377 = vpack.c.b16 %v365, %v364
    %v378 = vpack.c.b16 %v367, %v366
    %v379 = vpack.c.b16 %v369, %v368
    %v380 = vpack.c.b16 %v371, %v370
    %v381 = vpack.c.b16 %v373, %v372
    %390 = vmatprep.subr.bf16.mxu0 0
    %391 = vmatpush1.bf16.msra.mxu0 %v374
    %392 = vmatprep.subr.bf16.mxu0 0
    %393 = vmatpush1.bf16.msra.mxu0 %v375
    %394 = vmatprep.subr.bf16.mxu0 0
    %395 = vmatpush1.bf16.msra.mxu0 %v376
    %396 = vmatprep.subr.bf16.mxu0 0
    %397 = vmatpush1.bf16.msra.mxu0 %v377
    %398 = vmatprep.subr.bf16.mxu0 0
    %399 = vmatpush1.bf16.msra.mxu0 %v378
    %400 = vmatprep.subr.bf16.mxu0 0
    %401 = vmatpush1.bf16.msra.mxu0 %v379
    %402 = vmatprep.subr.bf16.mxu0 0
    %403 = vmatpush1.bf16.msra.mxu0 %v380
    %404 = vmatprep.subr.bf16.mxu0 0
    %405 = vmatpush1.bf16.msra.mxu0 %v381
    %406 = vmatprep.subr.bf16.mxu0 0
    %407 = vmatpush1.bf16.msra.mxu0 0
    %408 = vmatprep.subr.bf16.mxu0 0
    %409 = vmatpush1.bf16.msra.mxu0 0
    %410 = vmatprep.subr.bf16.mxu0 0
    %411 = vmatpush1.bf16.msra.mxu0 0
    %412 = vmatprep.subr.bf16.mxu0 0
    %413 = vmatpush1.bf16.msra.mxu0 0
    %414 = vmatprep.subr.bf16.mxu0 0
    %415 = vmatpush1.bf16.msra.mxu0 0
    %416 = vmatprep.subr.bf16.mxu0 0
    %417 = vmatpush1.bf16.msra.mxu0 0
    %418 = vmatprep.subr.bf16.mxu0 0
    %419 = vmatpush1.bf16.msra.mxu0 0
    %420 = vmatprep.subr.bf16.mxu0 0
    %421 = vmatpush1.bf16.msra.mxu0 0
    %422 = vmatprep.mubr.bf16.mxu0 0
    %423 = vmatmul.mubr.bf16.gmra.mrb[0].mxu0 %v340
    %v424 = vpop.f32.mrb[0].mxu0
    %v425 = vadd.f32 0.0, %v424
    %v426 = vpop.f32.mrb[0].mxu0
    %v427 = vpop.f32.mrb[0].mxu0
    %v428 = vpop.f32.mrb[0].mxu0
    %429 = vdwg.mxu0
    %v430 = vadd.f32 %v316, %v425
    %v431 = vld [vmem:[#allocation2] sm:$0x1e]
    %s432 = scalar_lea.vmem [#allocation4], 192
    %v433 = vld [vmem:[%s432] sm:$0xf]
    %v434 = vld [vmem:[%s432 + $0x4] sm:$0xf]
    %v435 = vld [vmem:[%s432 + $0x8] sm:$0xf]
    %v436 = vld [vmem:[%s432 + $0xc] sm:$0xf]
    %v437 = vld [vmem:[%s432 + $0x10] sm:$0xf]
    %v438 = vld [vmem:[%s432 + $0x14] sm:$0xf]
    %v439 = vld [vmem:[%s432 + $0x18] sm:$0xf]
    %v440 = vld [vmem:[%s432 + $0x1c] sm:$0xf]
    %v441 = vld [vmem:[%s432 + $0x20] sm:$0xf]
    %v442 = vld [vmem:[%s432 + $0x24] sm:$0xf]
    %v443 = vld [vmem:[%s432 + $0x28] sm:$0xf]
    %v444 = vld [vmem:[%s432 + $0x2c] sm:$0xf]
    %v445 = vld [vmem:[%s432 + $0x30] sm:$0xf]
    %v446 = vld [vmem:[%s432 + $0x34] sm:$0xf]
    %v447 = vld [vmem:[%s432 + $0x38] sm:$0xf]
    %v448 = vld [vmem:[%s432 + $0x3c] sm:$0xf]
    %v450 = vrot.slane %v431, 1
    %v468 = vunpack.c.l.b16 %v433
    %v469 = vunpack.c.l.b16 %v434
    %v470 = vunpack.c.l.b16 %v435
    %v471 = vunpack.c.l.b16 %v436
    %v472 = vunpack.c.l.b16 %v437
    %v473 = vunpack.c.l.b16 %v438
    %v474 = vunpack.c.l.b16 %v439
    %v475 = vunpack.c.l.b16 %v440
    %v476 = vunpack.c.l.b16 %v441
    %v477 = vunpack.c.l.b16 %v442
    %v478 = vunpack.c.l.b16 %v443
    %v479 = vunpack.c.l.b16 %v444
    %v480 = vunpack.c.l.b16 %v445
    %v481 = vunpack.c.l.b16 %v446
    %v482 = vunpack.c.l.b16 %v447
    %v483 = vunpack.c.l.b16 %v448
    %v484 = vpack.c.b16 %v469, %v468
    %v485 = vpack.c.b16 %v471, %v470
    %v486 = vpack.c.b16 %v473, %v472
    %v487 = vpack.c.b16 %v475, %v474
    %v488 = vpack.c.b16 %v477, %v476
    %v489 = vpack.c.b16 %v479, %v478
    %v490 = vpack.c.b16 %v481, %v480
    %v491 = vpack.c.b16 %v483, %v482
    %500 = vmatprep.subr.bf16.mxu0 0
    %501 = vmatpush1.bf16.msra.mxu0 %v484
    %502 = vmatprep.subr.bf16.mxu0 0
    %503 = vmatpush1.bf16.msra.mxu0 %v485
    %504 = vmatprep.subr.bf16.mxu0 0
    %505 = vmatpush1.bf16.msra.mxu0 %v486
    %506 = vmatprep.subr.bf16.mxu0 0
    %507 = vmatpush1.bf16.msra.mxu0 %v487
    %508 = vmatprep.subr.bf16.mxu0 0
    %509 = vmatpush1.bf16.msra.mxu0 %v488
    %510 = vmatprep.subr.bf16.mxu0 0
    %511 = vmatpush1.bf16.msra.mxu0 %v489
    %512 = vmatprep.subr.bf16.mxu0 0
    %513 = vmatpush1.bf16.msra.mxu0 %v490
    %514 = vmatprep.subr.bf16.mxu0 0
    %515 = vmatpush1.bf16.msra.mxu0 %v491
    %516 = vmatprep.subr.bf16.mxu0 0
    %517 = vmatpush1.bf16.msra.mxu0 0
    %518 = vmatprep.subr.bf16.mxu0 0
    %519 = vmatpush1.bf16.msra.mxu0 0
    %520 = vmatprep.subr.bf16.mxu0 0
    %521 = vmatpush1.bf16.msra.mxu0 0
    %522 = vmatprep.subr.bf16.mxu0 0
    %523 = vmatpush1.bf16.msra.mxu0 0
    %524 = vmatprep.subr.bf16.mxu0 0
    %525 = vmatpush1.bf16.msra.mxu0 0
    %526 = vmatprep.subr.bf16.mxu0 0
    %527 = vmatpush1.bf16.msra.mxu0 0
    %528 = vmatprep.subr.bf16.mxu0 0
    %529 = vmatpush1.bf16.msra.mxu0 0
    %530 = vmatprep.subr.bf16.mxu0 0
    %531 = vmatpush1.bf16.msra.mxu0 0
    %532 = vmatprep.mubr.bf16.mxu0 0
    %533 = vmatmul.mubr.bf16.gmra.mrb[0].mxu0 %v450
    %v534 = vpop.f32.mrb[0].mxu0
    %v535 = vadd.f32 0.0, %v534
    %v536 = vpop.f32.mrb[0].mxu0
    %v537 = vpop.f32.mrb[0].mxu0
    %v538 = vpop.f32.mrb[0].mxu0
    %539 = vdwg.mxu0
    %v540 = vadd.f32 %v430, %v535
    %v541 = vld [vmem:[%s2] sm:$0x1]
    %v542 = vld [vmem:[%s3] sm:$0x1]
    %v543 = vrot.slane %v540, 4
    %v544 = vadd.f32 %v540, %v543
    %v545 = vrot.slane %v544, 2
    %v546 = vadd.f32 %v544, %v545
    %v547 = vrot.slane %v546, 1
    %v548 = vadd.f32 %v546, %v547
    %v549 = vmul.f32 %v548, 0.125
    %v550 = vsub.f32 %v540, %v549
    %v551 = vmul.f32 %v550, %v550
    %v552 = vrot.slane %v551, 4
    %v553 = vadd.f32 %v551, %v552
    %v554 = vrot.slane %v553, 2
    %v555 = vadd.f32 %v553, %v554
    %v556 = vrot.slane %v555, 1
    %v557 = vadd.f32 %v555, %v556
    %v558 = vmul.f32 %v557, 0.125
    %v559 = vadd.f32 %v558, 1e-05
    %v560 = vrsqrt.pop %v559
    %v561 = vmul.f32 %v560, %v541
    %v562 = vmul.f32 %v549, %v561
    %v563 = vsub.f32 %v542, %v562
    %v564 = vlaneseq
    %v565 = vshrl.u32 %v564, 7
    %v566 = vsub.s32 0, %v565
    %v567 = vrot.slane %v561, %v566
    %v568 = vmul.f32 %v540, %v567
    %v570 = vlaneseq
    %v571 = vshrl.u32 %v570, 7
    %v572 = vsub.s32 0, %v571
    %v573 = vrot.slane %v563, %v572
    %v575 = vadd.f32 %v568, %v573
    %v576 = vmax.f32 %v575, 0.0
    %v577 = vpack.c.bf16 %v576, %v576
    %v579 = vrot.slane %v577, 4
    %581 = vst [vmem:[#allocation3] sm:$0xf0] %v579
    %v582 = vld [vmem:[#allocation3] sm:$0xf0]
    %v583 = vld [vmem:[#allocation3] sm:$0x78]
    %v584 = vld [vmem:[#allocation3] sm:$0xe0]
    %v585 = vld [vmem:[#allocation3 + $0x8] sm:$0x1]
    %s586 = scalar_lea.vmem [#allocation6], 64
    %v587 = vld [vmem:[%s586] sm:$0xf]
    %v588 = vld [vmem:[%s586 + $0x4] sm:$0xf]
    %v589 = vld [vmem:[%s586 + $0x8] sm:$0xf]
    %v590 = vld [vmem:[%s586 + $0xc] sm:$0xf]
    %v591 = vld [vmem:[%s586 + $0x10] sm:$0xf]
    %v592 = vld [vmem:[%s586 + $0x14] sm:$0xf]
    %v593 = vld [vmem:[%s586 + $0x18] sm:$0xf]
    %v594 = vld [vmem:[%s586 + $0x1c] sm:$0xf]
    %v595 = vld [vmem:[%s586 + $0x20] sm:$0xf]
    %v596 = vld [vmem:[%s586 + $0x24] sm:$0xf]
    %v597 = vld [vmem:[%s586 + $0x28] sm:$0xf]
    %v598 = vld [vmem:[%s586 + $0x2c] sm:$0xf]
    %v599 = vld [vmem:[%s586 + $0x30] sm:$0xf]
    %v600 = vld [vmem:[%s586 + $0x34] sm:$0xf]
    %v601 = vld [vmem:[%s586 + $0x38] sm:$0xf]
    %v602 = vld [vmem:[%s586 + $0x3c] sm:$0xf]
    %s603 = scalar_lea.vmem [#allocation6], 192
    %v604 = vld [vmem:[%s603] sm:$0xf]
    %v605 = vld [vmem:[%s603 + $0x4] sm:$0xf]
    %v606 = vld [vmem:[%s603 + $0x8] sm:$0xf]
    %v607 = vld [vmem:[%s603 + $0xc] sm:$0xf]
    %v608 = vld [vmem:[%s603 + $0x10] sm:$0xf]
    %v609 = vld [vmem:[%s603 + $0x14] sm:$0xf]
    %v610 = vld [vmem:[%s603 + $0x18] sm:$0xf]
    %v611 = vld [vmem:[%s603 + $0x1c] sm:$0xf]
    %v612 = vld [vmem:[%s603 + $0x20] sm:$0xf]
    %v613 = vld [vmem:[%s603 + $0x24] sm:$0xf]
    %v614 = vld [vmem:[%s603 + $0x28] sm:$0xf]
    %v615 = vld [vmem:[%s603 + $0x2c] sm:$0xf]
    %v616 = vld [vmem:[%s603 + $0x30] sm:$0xf]
    %v617 = vld [vmem:[%s603 + $0x34] sm:$0xf]
    %v618 = vld [vmem:[%s603 + $0x38] sm:$0xf]
    %v619 = vld [vmem:[%s603 + $0x3c] sm:$0xf]
    %v621 = vrot.slane %v583, 3
    %v639 = vunpack.c.l.b16 %v604
    %v640 = vunpack.c.l.b16 %v605
    %v641 = vunpack.c.l.b16 %v606
    %v642 = vunpack.c.l.b16 %v607
    %v643 = vunpack.c.l.b16 %v608
    %v644 = vunpack.c.l.b16 %v609
    %v645 = vunpack.c.l.b16 %v610
    %v646 = vunpack.c.l.b16 %v611
    %v647 = vunpack.c.l.b16 %v612
    %v648 = vunpack.c.l.b16 %v613
    %v649 = vunpack.c.l.b16 %v614
    %v650 = vunpack.c.l.b16 %v615
    %v651 = vunpack.c.l.b16 %v616
    %v652 = vunpack.c.l.b16 %v617
    %v653 = vunpack.c.l.b16 %v618
    %v654 = vunpack.c.l.b16 %v619
    %v655 = vpack.c.b16 %v640, %v639
    %v656 = vpack.c.b16 %v642, %v641
    %v657 = vpack.c.b16 %v644, %v643
    %v658 = vpack.c.b16 %v646, %v645
    %v659 = vpack.c.b16 %v648, %v647
    %v660 = vpack.c.b16 %v650, %v649
    %v661 = vpack.c.b16 %v652, %v651
    %v662 = vpack.c.b16 %v654, %v653
    %671 = vmatprep.subr.bf16.mxu0 0
    %672 = vmatpush1.bf16.msra.mxu0 %v655
    %673 = vmatprep.subr.bf16.mxu0 0
    %674 = vmatpush1.bf16.msra.mxu0 %v656
    %675 = vmatprep.subr.bf16.mxu0 0
    %676 = vmatpush1.bf16.msra.mxu0 %v657
    %677 = vmatprep.subr.bf16.mxu0 0
    %678 = vmatpush1.bf16.msra.mxu0 %v658
    %679 = vmatprep.subr.bf16.mxu0 0
    %680 = vmatpush1.bf16.msra.mxu0 %v659
    %681 = vmatprep.subr.bf16.mxu0 0
    %682 = vmatpush1.bf16.msra.mxu0 %v660
    %683 = vmatprep.subr.bf16.mxu0 0
    %684 = vmatpush1.bf16.msra.mxu0 %v661
    %685 = vmatprep.subr.bf16.mxu0 0
    %686 = vmatpush1.bf16.msra.mxu0 %v662
    %687 = vmatprep.subr.bf16.mxu0 0
    %688 = vmatpush1.bf16.msra.mxu0 0
    %689 = vmatprep.subr.bf16.mxu0 0
    %690 = vmatpush1.bf16.msra.mxu0 0
    %691 = vmatprep.subr.bf16.mxu0 0
    %692 = vmatpush1.bf16.msra.mxu0 0
    %693 = vmatprep.subr.bf16.mxu0 0
    %694 = vmatpush1.bf16.msra.mxu0 0
    %695 = vmatprep.subr.bf16.mxu0 0
    %696 = vmatpush1.bf16.msra.mxu0 0
    %697 = vmatprep.subr.bf16.mxu0 0
    %698 = vmatpush1.bf16.msra.mxu0 0
    %699 = vmatprep.subr.bf16.mxu0 0
    %700 = vmatpush1.bf16.msra.mxu0 0
    %701 = vmatprep.subr.bf16.mxu0 0
    %702 = vmatpush1.bf16.msra.mxu0 0
    %703 = vmatprep.mubr.bf16.mxu0 0
    %704 = vmatmul.mubr.bf16.gmra.mrb[0].mxu0 %v621
    %v705 = vpop.f32.mrb[0].mxu0
    %v706 = vadd.f32 0.0, %v705
    %v707 = vpop.f32.mrb[0].mxu0
    %v708 = vpop.f32.mrb[0].mxu0
    %v709 = vpop.f32.mrb[0].mxu0
    %710 = vdwg.mxu0
    %v712 = vrot.slane %v582, 4
    %v730 = vunpack.c.l.b16 %v587
    %v731 = vunpack.c.l.b16 %v588
    %v732 = vunpack.c.l.b16 %v589
    %v733 = vunpack.c.l.b16 %v590
    %v734 = vunpack.c.l.b16 %v591
    %v735 = vunpack.c.l.b16 %v592
    %v736 = vunpack.c.l.b16 %v593
    %v737 = vunpack.c.l.b16 %v594
    %v738 = vunpack.c.l.b16 %v595
    %v739 = vunpack.c.l.b16 %v596
    %v740 = vunpack.c.l.b16 %v597
    %v741 = vunpack.c.l.b16 %v598
    %v742 = vunpack.c.l.b16 %v599
    %v743 = vunpack.c.l.b16 %v600
    %v744 = vunpack.c.l.b16 %v601
    %v745 = vunpack.c.l.b16 %v602
    %v746 = vpack.c.b16 %v731, %v730
    %v747 = vpack.c.b16 %v733, %v732
    %v748 = vpack.c.b16 %v735, %v734
    %v749 = vpack.c.b16 %v737, %v736
    %v750 = vpack.c.b16 %v739, %v738
    %v751 = vpack.c.b16 %v741, %v740
    %v752 = vpack.c.b16 %v743, %v742
    %v753 = vpack.c.b16 %v745, %v744
    %762 = vmatprep.subr.bf16.mxu0 0
    %763 = vmatpush1.bf16.msra.mxu0 %v746
    %764 = vmatprep.subr.bf16.mxu0 0
    %765 = vmatpush1.bf16.msra.mxu0 %v747
    %766 = vmatprep.subr.bf16.mxu0 0
    %767 = vmatpush1.bf16.msra.mxu0 %v748
    %768 = vmatprep.subr.bf16.mxu0 0
    %769 = vmatpush1.bf16.msra.mxu0 %v749
    %770 = vmatprep.subr.bf16.mxu0 0
    %771 = vmatpush1.bf16.msra.mxu0 %v750
    %772 = vmatprep.subr.bf16.mxu0 0
    %773 = vmatpush1.bf16.msra.mxu0 %v751
    %774 = vmatprep.subr.bf16.mxu0 0
    %775 = vmatpush1.bf16.msra.mxu0 %v752
    %776 = vmatprep.subr.bf16.mxu0 0
    %777 = vmatpush1.bf16.msra.mxu0 %v753
    %778 = vmatprep.subr.bf16.mxu0 0
    %779 = vmatpush1.bf16.msra.mxu0 0
    %780 = vmatprep.subr.bf16.mxu0 0
    %781 = vmatpush1.bf16.msra.mxu0 0
    %782 = vmatprep.subr.bf16.mxu0 0
    %783 = vmatpush1.bf16.msra.mxu0 0
    %784 = vmatprep.subr.bf16.mxu0 0
    %785 = vmatpush1.bf16.msra.mxu0 0
    %786 = vmatprep.subr.bf16.mxu0 0
    %787 = vmatpush1.bf16.msra.mxu0 0
    %788 = vmatprep.subr.bf16.mxu0 0
    %789 = vmatpush1.bf16.msra.mxu0 0
    %790 = vmatprep.subr.bf16.mxu0 0
    %791 = vmatpush1.bf16.msra.mxu0 0
    %792 = vmatprep.subr.bf16.mxu0 0
    %793 = vmatpush1.bf16.msra.mxu0 0
    %794 = vmatprep.mubr.bf16.mxu0 0
    %795 = vmatmul.mubr.bf16.gmra.mrb[0].mxu0 %v712
    %v796 = vpop.f32.mrb[0].mxu0
    %v797 = vadd.f32 %v706, %v796
    %v798 = vpop.f32.mrb[0].mxu0
    %v799 = vpop.f32.mrb[0].mxu0
    %v800 = vpop.f32.mrb[0].mxu0
    %801 = vdwg.mxu0
    %s802 = scalar_lea.vmem [#allocation6], 128
    %v803 = vld [vmem:[%s802] sm:$0xf]
    %v804 = vld [vmem:[%s802 + $0x4] sm:$0xf]
    %v805 = vld [vmem:[%s802 + $0x8] sm:$0xf]
    %v806 = vld [vmem:[%s802 + $0xc] sm:$0xf]
    %v807 = vld [vmem:[%s802 + $0x10] sm:$0xf]
    %v808 = vld [vmem:[%s802 + $0x14] sm:$0xf]
    %v809 = vld [vmem:[%s802 + $0x18] sm:$0xf]
    %v810 = vld [vmem:[%s802 + $0x1c] sm:$0xf]
    %v811 = vld [vmem:[%s802 + $0x20] sm:$0xf]
    %v812 = vld [vmem:[%s802 + $0x24] sm:$0xf]
    %v813 = vld [vmem:[%s802 + $0x28] sm:$0xf]
    %v814 = vld [vmem:[%s802 + $0x2c] sm:$0xf]
    %v815 = vld [vmem:[%s802 + $0x30] sm:$0xf]
    %v816 = vld [vmem:[%s802 + $0x34] sm:$0xf]
    %v817 = vld [vmem:[%s802 + $0x38] sm:$0xf]
    %v818 = vld [vmem:[%s802 + $0x3c] sm:$0xf]
    %v819 = vld [vmem:[#allocation6] sm:$0xf]
    %v820 = vld [vmem:[#allocation6 + $0x4] sm:$0xf]
    %v821 = vld [vmem:[#allocation6 + $0x8] sm:$0xf]
    %v822 = vld [vmem:[#allocation6 + $0xc] sm:$0xf]
    %v823 = vld [vmem:[#allocation6 + $0x10] sm:$0xf]
    %v824 = vld [vmem:[#allocation6 + $0x14] sm:$0xf]
    %v825 = vld [vmem:[#allocation6 + $0x18] sm:$0xf]
    %v826 = vld [vmem:[#allocation6 + $0x1c] sm:$0xf]
    %v827 = vld [vmem:[#allocation6 + $0x20] sm:$0xf]
    %v828 = vld [vmem:[#allocation6 + $0x24] sm:$0xf]
    %v829 = vld [vmem:[#allocation6 + $0x28] sm:$0xf]
    %v830 = vld [vmem:[#allocation6 + $0x2c] sm:$0xf]
    %v831 = vld [vmem:[#allocation6 + $0x30] sm:$0xf]
    %v832 = vld [vmem:[#allocation6 + $0x34] sm:$0xf]
    %v833 = vld [vmem:[#allocation6 + $0x38] sm:$0xf]
    %v834 = vld [vmem:[#allocation6 + $0x3c] sm:$0xf]
    %vm837 = vcmask 1042432
    %v838 = vrot.slane %v584, 5
    %v839 = vrot.slane %v585, 5
    %v840 = vsel %vm837, %v838, %v839
    %v858 = vunpack.c.l.b16 %v819
    %v859 = vunpack.c.l.b16 %v820
    %v860 = vunpack.c.l.b16 %v821
    %v861 = vunpack.c.l.b16 %v822
    %v862 = vunpack.c.l.b16 %v823
    %v863 = vunpack.c.l.b16 %v824
    %v864 = vunpack.c.l.b16 %v825
    %v865 = vunpack.c.l.b16 %v826
    %v866 = vunpack.c.l.b16 %v827
    %v867 = vunpack.c.l.b16 %v828
    %v868 = vunpack.c.l.b16 %v829
    %v869 = vunpack.c.l.b16 %v830
    %v870 = vunpack.c.l.b16 %v831
    %v871 = vunpack.c.l.b16 %v832
    %v872 = vunpack.c.l.b16 %v833
    %v873 = vunpack.c.l.b16 %v834
    %v874 = vpack.c.b16 %v859, %v858
    %v875 = vpack.c.b16 %v861, %v860
    %v876 = vpack.c.b16 %v863, %v862
    %v877 = vpack.c.b16 %v865, %v864
    %v878 = vpack.c.b16 %v867, %v866
    %v879 = vpack.c.b16 %v869, %v868
    %v880 = vpack.c.b16 %v871, %v870
    %v881 = vpack.c.b16 %v873, %v872
    %890 = vmatprep.subr.bf16.mxu0 0
    %891 = vmatpush1.bf16.msra.mxu0 %v874
    %892 = vmatprep.subr.bf16.mxu0 0
    %893 = vmatpush1.bf16.msra.mxu0 %v875
    %894 = vmatprep.subr.bf16.mxu0 0
    %895 = vmatpush1.bf16.msra.mxu0 %v876
    %896 = vmatprep.subr.bf16.mxu0 0
    %897 = vmatpush1.bf16.msra.mxu0 %v877
    %898 = vmatprep.subr.bf16.mxu0 0
    %899 = vmatpush1.bf16.msra.mxu0 %v878
    %900 = vmatprep.subr.bf16.mxu0 0
    %901 = vmatpush1.bf16.msra.mxu0 %v879
    %902 = vmatprep.subr.bf16.mxu0 0
    %903 = vmatpush1.bf16.msra.mxu0 %v880
    %904 = vmatprep.subr.bf16.mxu0 0
    %905 = vmatpush1.bf16.msra.mxu0 %v881
    %906 = vmatprep.subr.bf16.mxu0 0
    %907 = vmatpush1.bf16.msra.mxu0 0
    %908 = vmatprep.subr.bf16.mxu0 0
    %909 = vmatpush1.bf16.msra.mxu0 0
    %910 = vmatprep.subr.bf16.mxu0 0
    %911 = vmatpush1.bf16.msra.mxu0 0
    %912 = vmatprep.subr.bf16.mxu0 0
    %913 = vmatpush1.bf16.msra.mxu0 0
    %914 = vmatprep.subr.bf16.mxu0 0
    %915 = vmatpush1.bf16.msra.mxu0 0
    %916 = vmatprep.subr.bf16.mxu0 0
    %917 = vmatpush1.bf16.msra.mxu0 0
    %918 = vmatprep.subr.bf16.mxu0 0
    %919 = vmatpush1.bf16.msra.mxu0 0
    %920 = vmatprep.subr.bf16.mxu0 0
    %921 = vmatpush1.bf16.msra.mxu0 0
    %922 = vmatprep.mubr.bf16.mxu0 0
    %923 = vmatmul.mubr.bf16.gmra.mrb[0].mxu0 %v840
    %v924 = vpop.f32.mrb[0].mxu0
    %v925 = vadd.f32 0.0, %v924
    %v926 = vpop.f32.mrb[0].mxu0
    %v927 = vpop.f32.mrb[0].mxu0
    %v928 = vpop.f32.mrb[0].mxu0
    %929 = vdwg.mxu0
    %v946 = vunpack.c.l.b16 %v803
    %v947 = vunpack.c.l.b16 %v804
    %v948 = vunpack.c.l.b16 %v805
    %v949 = vunpack.c.l.b16 %v806
    %v950 = vunpack.c.l.b16 %v807
    %v951 = vunpack.c.l.b16 %v808
    %v952 = vunpack.c.l.b16 %v809
    %v953 = vunpack.c.l.b16 %v810
    %v954 = vunpack.c.l.b16 %v811
    %v955 = vunpack.c.l.b16 %v812
    %v956 = vunpack.c.l.b16 %v813
    %v957 = vunpack.c.l.b16 %v814
    %v958 = vunpack.c.l.b16 %v815
    %v959 = vunpack.c.l.b16 %v816
    %v960 = vunpack.c.l.b16 %v817
    %v961 = vunpack.c.l.b16 %v818
    %v962 = vpack.c.b16 %v947, %v946
    %v963 = vpack.c.b16 %v949, %v948
    %v964 = vpack.c.b16 %v951, %v950
    %v965 = vpack.c.b16 %v953, %v952
    %v966 = vpack.c.b16 %v955, %v954
    %v967 = vpack.c.b16 %v957, %v956
    %v968 = vpack.c.b16 %v959, %v958
    %v969 = vpack.c.b16 %v961, %v960
    %978 = vmatprep.subr.bf16.mxu0 0
    %979 = vmatpush1.bf16.msra.mxu0 %v962
    %980 = vmatprep.subr.bf16.mxu0 0
    %981 = vmatpush1.bf16.msra.mxu0 %v963
    %982 = vmatprep.subr.bf16.mxu0 0
    %983 = vmatpush1.bf16.msra.mxu0 %v964
    %984 = vmatprep.subr.bf16.mxu0 0
    %985 = vmatpush1.bf16.msra.mxu0 %v965
    %986 = vmatprep.subr.bf16.mxu0 0
    %987 = vmatpush1.bf16.msra.mxu0 %v966
    %988 = vmatprep.subr.bf16.mxu0 0
    %989 = vmatpush1.bf16.msra.mxu0 %v967
    %990 = vmatprep.subr.bf16.mxu0 0
    %991 = vmatpush1.bf16.msra.mxu0 %v968
    %992 = vmatprep.subr.bf16.mxu0 0
    %993 = vmatpush1.bf16.msra.mxu0 %v969
    %994 = vmatprep.subr.bf16.mxu0 0
    %995 = vmatpush1.bf16.msra.mxu0 0
    %996 = vmatprep.subr.bf16.mxu0 0
    %997 = vmatpush1.bf16.msra.mxu0 0
    %998 = vmatprep.subr.bf16.mxu0 0
    %999 = vmatpush1.bf16.msra.mxu0 0
    %1000 = vmatprep.subr.bf16.mxu0 0
    %1001 = vmatpush1.bf16.msra.mxu0 0
    %1002 = vmatprep.subr.bf16.mxu0 0
    %1003 = vmatpush1.bf16.msra.mxu0 0
    %1004 = vmatprep.subr.bf16.mxu0 0
    %1005 = vmatpush1.bf16.msra.mxu0 0
    %1006 = vmatprep.subr.bf16.mxu0 0
    %1007 = vmatpush1.bf16.msra.mxu0 0
    %1008 = vmatprep.subr.bf16.mxu0 0
    %1009 = vmatpush1.bf16.msra.mxu0 0
    %1010 = vmatprep.mubr.bf16.mxu0 0
    %1011 = vmatmul.mubr.bf16.gmra.mrb[0].mxu0 %v712
    %v1012 = vpop.f32.mrb[0].mxu0
    %v1013 = vadd.f32 %v925, %v1012
    %v1014 = vpop.f32.mrb[0].mxu0
    %v1015 = vpop.f32.mrb[0].mxu0
    %v1016 = vpop.f32.mrb[0].mxu0
    %1017 = vdwg.mxu0
    %v1018 = vld [vmem:[%s5] sm:$0x1]
    %v1019 = vld [vmem:[%s6] sm:$0x1]
    %v1020 = vrot.slane %v797, 4
    %v1021 = vadd.f32 %v797, %v1020
    %v1022 = vrot.slane %v1021, 2
    %v1023 = vadd.f32 %v1021, %v1022
    %v1024 = vrot.slane %v1023, 1
    %v1025 = vadd.f32 %v1023, %v1024
    %v1026 = vrot.slane %v1013, 4
    %v1027 = vadd.f32 %v1013, %v1026
    %v1028 = vrot.slane %v1027, 2
    %v1029 = vadd.f32 %v1027, %v1028
    %v1030 = vrot.slane %v1029, 1
    %v1031 = vadd.f32 %v1029, %v1030
    %v1032 = vadd.f32 %v1025, %v1031
    %v1033 = vmul.f32 %v1032, 0.0625
    %v1034 = vsub.f32 %v797, %v1033
    %v1035 = vmul.f32 %v1034, %v1034
    %v1036 = vrot.slane %v1035, 4
    %v1037 = vadd.f32 %v1035, %v1036
    %v1038 = vrot.slane %v1037, 2
    %v1039 = vadd.f32 %v1037, %v1038
    %v1040 = vrot.slane %v1039, 1
    %v1041 = vadd.f32 %v1039, %v1040
    %v1042 = vsub.f32 %v1013, %v1033
    %v1043 = vmul.f32 %v1042, %v1042
    %v1044 = vrot.slane %v1043, 4
    %v1045 = vadd.f32 %v1043, %v1044
    %v1046 = vrot.slane %v1045, 2
    %v1047 = vadd.f32 %v1045, %v1046
    %v1048 = vrot.slane %v1047, 1
    %v1049 = vadd.f32 %v1047, %v1048
    %v1050 = vadd.f32 %v1041, %v1049
    %v1051 = vmul.f32 %v1050, 0.0625
    %v1052 = vadd.f32 %v1051, 1e-05
    %v1053 = vrsqrt.pop %v1052
    %v1054 = vmul.f32 %v1053, %v1018
    %v1055 = vmul.f32 %v1033, %v1054
    %v1056 = vsub.f32 %v1019, %v1055
    %v1057 = vlaneseq
    %v1058 = vshrl.u32 %v1057, 7
    %v1059 = vsub.s32 0, %v1058
    %v1060 = vrot.slane %v1054, %v1059
    %v1061 = vmul.f32 %v797, %v1060
    %v1063 = vlaneseq
    %v1064 = vshrl.u32 %v1063, 7
    %v1065 = vsub.s32 0, %v1064
    %v1066 = vrot.slane %v1056, %v1065
    %v1068 = vadd.f32 %v1061, %v1066
    %v1069 = vmax.f32 %v1068, 0.0
    %v1070 = vmul.f32 %v1013, %v1060
    %v1071 = vadd.f32 %v1070, %v1066
    %v1072 = vmax.f32 %v1071, 0.0
    %v1074 = vcombine.high %v1069, %v1069
    %v1076 = vunpack.c.l.s4 1983009808
    %v1077 = vunpack.c.0.s8 %v1076
    %v1078 = vlaneseq
    %v1079 = vshrl.u32 %v1078, 7
    %v1080 = vsub.s32 %v1077, %v1079
    %v1081 = vrot.slane %v1069, %v1080
    %v1083 = vunpack.c.l.s4 1983009808
    %v1084 = vunpack.c.0.s8 %v1083
    %v1085 = vlaneseq
    %v1086 = vshrl.u32 %v1085, 7
    %v1087 = vsub.s32 %v1084, %v1086
    %v1088 = vrot.slane %v1074, %v1087
    %v1089 = vcombine.high %v1081, %v1081
    %v1090 = vcombine.high %v1088, %v1088
    %v1096 = vcombine.high %v1072, %v1072
    %v1098 = vunpack.c.l.s4 1983009808
    %v1099 = vunpack.c.0.s8 %v1098
    %v1100 = vlaneseq
    %v1101 = vshrl.u32 %v1100, 7
    %v1102 = vsub.s32 %v1099, %v1101
    %v1103 = vrot.slane %v1072, %v1102
    %v1105 = vunpack.c.l.s4 1983009808
    %v1106 = vunpack.c.0.s8 %v1105
    %v1107 = vlaneseq
    %v1108 = vshrl.u32 %v1107, 7
    %v1109 = vsub.s32 %v1106, %v1108
    %v1110 = vrot.slane %v1096, %v1109
    %v1111 = vcombine.high %v1103, %v1103
    %v1112 = vcombine.high %v1110, %v1110
    %v1113 = vcombine.low %v1103, %v1103
    %v1115 = vunpack.c.l.s4 1983009808
    %v1116 = vunpack.c.0.s8 %v1115
    %v1117 = vlaneseq
    %v1118 = vshrl.u32 %v1117, 7
    %v1119 = vsub.s32 %v1116, %v1118
    %v1120 = vrot.slane %v1113, %v1119
    %v1121 = vcombine.low %v1111, %v1111
    %v1123 = vunpack.c.l.s4 1983009808
    %v1124 = vunpack.c.0.s8 %v1123
    %v1125 = vlaneseq
    %v1126 = vshrl.u32 %v1125, 7
    %v1127 = vsub.s32 %v1124, %v1126
    %v1128 = vrot.slane %v1121, %v1127
    %v1129 = vcombine.low %v1110, %v1110
    %v1131 = vunpack.c.l.s4 1983009808
    %v1132 = vunpack.c.0.s8 %v1131
    %v1133 = vlaneseq
    %v1134 = vshrl.u32 %v1133, 7
    %v1135 = vsub.s32 %v1132, %v1134
    %v1136 = vrot.slane %v1129, %v1135
    %v1137 = vcombine.low %v1112, %v1112
    %v1139 = vunpack.c.l.s4 1983009808
    %v1140 = vunpack.c.0.s8 %v1139
    %v1141 = vlaneseq
    %v1142 = vshrl.u32 %v1141, 7
    %v1143 = vsub.s32 %v1140, %v1142
    %v1144 = vrot.slane %v1137, %v1143
    %vm1149 = vcmask 1041408
    %v1150 = vsel %vm1149, %v1081, %v1120
    %v1151 = vsel %vm1149, %v1089, %v1128
    %v1152 = vsel %vm1149, %v1088, %v1136
    %v1153 = vsel %vm1149, %v1090, %v1144
    %v1158 = vcombine.low %v1150, %v1151
    %v1159 = vcombine.low %v1152, %v1153
    %v1162 = vpack.c.bf16 %v1159, %v1158
    %v1164 = vrot.slane %v1162, 4
    %1166 = vst [vmem:[#allocation2] sm:$0xf0] %v1164
    %1167 = vst [vmem:[#allocation2 + $0x8] sm:$0xf] %v1164
    %v1168 = vld [vmem:[#allocation2] sm:$0xf8]
    %v1169 = vld [vmem:[#allocation2 + $0x8] sm:$0x7]
    %v1170 = vld [vmem:[#allocation8] sm:$0xf]
    %v1171 = vld [vmem:[#allocation8 + $0x4] sm:$0xf]
    %v1172 = vld [vmem:[#allocation8 + $0x8] sm:$0xf]
    %v1173 = vld [vmem:[#allocation8 + $0xc] sm:$0xf]
    %v1174 = vld [vmem:[#allocation8 + $0x10] sm:$0xf]
    %v1175 = vld [vmem:[#allocation8 + $0x14] sm:$0xf]
    %v1176 = vld [vmem:[#allocation8 + $0x18] sm:$0xf]
    %v1177 = vld [vmem:[#allocation8 + $0x1c] sm:$0xf]
    %v1178 = vld [vmem:[#allocation8 + $0x20] sm:$0xf]
    %v1179 = vld [vmem:[#allocation8 + $0x24] sm:$0xf]
    %v1180 = vld [vmem:[#allocation8 + $0x28] sm:$0xf]
    %v1181 = vld [vmem:[#allocation8 + $0x2c] sm:$0xf]
    %v1182 = vld [vmem:[#allocation8 + $0x30] sm:$0xf]
    %v1183 = vld [vmem:[#allocation8 + $0x34] sm:$0xf]
    %v1184 = vld [vmem:[#allocation8 + $0x38] sm:$0xf]
    %v1185 = vld [vmem:[#allocation8 + $0x3c] sm:$0xf]
    %v1186 = vld [vmem:[#allocation2] sm:$0xf0]
    %v1187 = vld [vmem:[#allocation2 + $0x8] sm:$0xf]
    %s1188 = scalar_lea.vmem [#allocation8], 64
    %v1189 = vld [vmem:[%s1188] sm:$0xf]
    %v1190 = vld [vmem:[%s1188 + $0x4] sm:$0xf]
    %v1191 = vld [vmem:[%s1188 + $0x8] sm:$0xf]
    %v1192 = vld [vmem:[%s1188 + $0xc] sm:$0xf]
    %v1193 = vld [vmem:[%s1188 + $0x10] sm:$0xf]
    %v1194 = vld [vmem:[%s1188 + $0x14] sm:$0xf]
    %v1195 = vld [vmem:[%s1188 + $0x18] sm:$0xf]
    %v1196 = vld [vmem:[%s1188 + $0x1c] sm:$0xf]
    %v1197 = vld [vmem:[%s1188 + $0x20] sm:$0xf]
    %v1198 = vld [vmem:[%s1188 + $0x24] sm:$0xf]
    %v1199 = vld [vmem:[%s1188 + $0x28] sm:$0xf]
    %v1200 = vld [vmem:[%s1188 + $0x2c] sm:$0xf]
    %v1201 = vld [vmem:[%s1188 + $0x30] sm:$0xf]
    %v1202 = vld [vmem:[%s1188 + $0x34] sm:$0xf]
    %v1203 = vld [vmem:[%s1188 + $0x38] sm:$0xf]
    %v1204 = vld [vmem:[%s1188 + $0x3c] sm:$0xf]
    %vm1207 = vcmask 1043456
    %v1208 = vrot.slane %v1186, 4
    %v1209 = vrot.slane %v1187, 4
    %v1210 = vsel %vm1207, %v1208, %v1209
    %v1228 = vunpack.c.l.b16 %v1189
    %v1229 = vunpack.c.l.b16 %v1190
    %v1230 = vunpack.c.l.b16 %v1191
    %v1231 = vunpack.c.l.b16 %v1192
    %v1232 = vunpack.c.l.b16 %v1193
    %v1233 = vunpack.c.l.b16 %v1194
    %v1234 = vunpack.c.l.b16 %v1195
    %v1235 = vunpack.c.l.b16 %v1196
    %v1236 = vunpack.c.l.b16 %v1197
    %v1237 = vunpack.c.l.b16 %v1198
    %v1238 = vunpack.c.l.b16 %v1199
    %v1239 = vunpack.c.l.b16 %v1200
    %v1240 = vunpack.c.l.b16 %v1201
    %v1241 = vunpack.c.l.b16 %v1202
    %v1242 = vunpack.c.l.b16 %v1203
    %v1243 = vunpack.c.l.b16 %v1204
    %v1244 = vpack.c.b16 %v1229, %v1228
    %v1245 = vpack.c.b16 %v1231, %v1230
    %v1246 = vpack.c.b16 %v1233, %v1232
    %v1247 = vpack.c.b16 %v1235, %v1234
    %v1248 = vpack.c.b16 %v1237, %v1236
    %v1249 = vpack.c.b16 %v1239, %v1238
    %v1250 = vpack.c.b16 %v1241, %v1240
    %v1251 = vpack.c.b16 %v1243, %v1242
    %1260 = vmatprep.subr.bf16.mxu0 0
    %1261 = vmatpush1.bf16.msra.mxu0 %v1244
    %1262 = vmatprep.subr.bf16.mxu0 0
    %1263 = vmatpush1.bf16.msra.mxu0 %v1245
    %1264 = vmatprep.subr.bf16.mxu0 0
    %1265 = vmatpush1.bf16.msra.mxu0 %v1246
    %1266 = vmatprep.subr.bf16.mxu0 0
    %1267 = vmatpush1.bf16.msra.mxu0 %v1247
    %1268 = vmatprep.subr.bf16.mxu0 0
    %1269 = vmatpush1.bf16.msra.mxu0 %v1248
    %1270 = vmatprep.subr.bf16.mxu0 0
    %1271 = vmatpush1.bf16.msra.mxu0 %v1249
    %1272 = vmatprep.subr.bf16.mxu0 0
    %1273 = vmatpush1.bf16.msra.mxu0 %v1250
    %1274 = vmatprep.subr.bf16.mxu0 0
    %1275 = vmatpush1.bf16.msra.mxu0 %v1251
    %1276 = vmatprep.subr.bf16.mxu0 0
    %1277 = vmatpush1.bf16.msra.mxu0 0
    %1278 = vmatprep.subr.bf16.mxu0 0
    %1279 = vmatpush1.bf16.msra.mxu0 0
    %1280 = vmatprep.subr.bf16.mxu0 0
    %1281 = vmatpush1.bf16.msra.mxu0 0
    %1282 = vmatprep.subr.bf16.mxu0 0
    %1283 = vmatpush1.bf16.msra.mxu0 0
    %1284 = vmatprep.subr.bf16.mxu0 0
    %1285 = vmatpush1.bf16.msra.mxu0 0
    %1286 = vmatprep.subr.bf16.mxu0 0
    %1287 = vmatpush1.bf16.msra.mxu0 0
    %1288 = vmatprep.subr.bf16.mxu0 0
    %1289 = vmatpush1.bf16.msra.mxu0 0
    %1290 = vmatprep.subr.bf16.mxu0 0
    %1291 = vmatpush1.bf16.msra.mxu0 0
    %1292 = vmatprep.mubr.bf16.mxu0 0
    %1293 = vmatmul.mubr.bf16.gmra.mrb[0].mxu0 %v1210
    %v1294 = vpop.f32.mrb[0].mxu0
    %v1295 = vadd.f32 0.0, %v1294
    %v1296 = vpop.f32.mrb[0].mxu0
    %v1297 = vpop.f32.mrb[0].mxu0
    %v1298 = vadd.f32 0.0, %v1297
    %v1299 = vpop.f32.mrb[0].mxu0
    %1300 = vdwg.mxu0
    %vm1303 = vcmask 1044480
    %v1304 = vrot.slane %v1168, 3
    %v1305 = vrot.slane %v1169, 3
    %v1306 = vsel %vm1303, %v1304, %v1305
    %v1324 = vunpack.c.l.b16 %v1170
    %v1325 = vunpack.c.l.b16 %v1171
    %v1326 = vunpack.c.l.b16 %v1172
    %v1327 = vunpack.c.l.b16 %v1173
    %v1328 = vunpack.c.l.b16 %v1174
    %v1329 = vunpack.c.l.b16 %v1175
    %v1330 = vunpack.c.l.b16 %v1176
    %v1331 = vunpack.c.l.b16 %v1177
    %v1332 = vunpack.c.l.b16 %v1178
    %v1333 = vunpack.c.l.b16 %v1179
    %v1334 = vunpack.c.l.b16 %v1180
    %v1335 = vunpack.c.l.b16 %v1181
    %v1336 = vunpack.c.l.b16 %v1182
    %v1337 = vunpack.c.l.b16 %v1183
    %v1338 = vunpack.c.l.b16 %v1184
    %v1339 = vunpack.c.l.b16 %v1185
    %v1340 = vpack.c.b16 %v1325, %v1324
    %v1341 = vpack.c.b16 %v1327, %v1326
    %v1342 = vpack.c.b16 %v1329, %v1328
    %v1343 = vpack.c.b16 %v1331, %v1330
    %v1344 = vpack.c.b16 %v1333, %v1332
    %v1345 = vpack.c.b16 %v1335, %v1334
    %v1346 = vpack.c.b16 %v1337, %v1336
    %v1347 = vpack.c.b16 %v1339, %v1338
    %1356 = vmatprep.subr.bf16.mxu0 0
    %1357 = vmatpush1.bf16.msra.mxu0 %v1340
    %1358 = vmatprep.subr.bf16.mxu0 0
    %1359 = vmatpush1.bf16.msra.mxu0 %v1341
    %1360 = vmatprep.subr.bf16.mxu0 0
    %1361 = vmatpush1.bf16.msra.mxu0 %v1342
    %1362 = vmatprep.subr.bf16.mxu0 0
    %1363 = vmatpush1.bf16.msra.mxu0 %v1343
    %1364 = vmatprep.subr.bf16.mxu0 0
    %1365 = vmatpush1.bf16.msra.mxu0 %v1344
    %1366 = vmatprep.subr.bf16.mxu0 0
    %1367 = vmatpush1.bf16.msra.mxu0 %v1345
    %1368 = vmatprep.subr.bf16.mxu0 0
    %1369 = vmatpush1.bf16.msra.mxu0 %v1346
    %1370 = vmatprep.subr.bf16.mxu0 0
    %1371 = vmatpush1.bf16.msra.mxu0 %v1347
    %1372 = vmatprep.subr.bf16.mxu0 0
    %1373 = vmatpush1.bf16.msra.mxu0 0
    %1374 = vmatprep.subr.bf16.mxu0 0
    %1375 = vmatpush1.bf16.msra.mxu0 0
    %1376 = vmatprep.subr.bf16.mxu0 0
    %1377 = vmatpush1.bf16.msra.mxu0 0
    %1378 = vmatprep.subr.bf16.mxu0 0
    %1379 = vmatpush1.bf16.msra.mxu0 0
    %1380 = vmatprep.subr.bf16.mxu0 0
    %1381 = vmatpush1.bf16.msra.mxu0 0
    %1382 = vmatprep.subr.bf16.mxu0 0
    %1383 = vmatpush1.bf16.msra.mxu0 0
    %1384 = vmatprep.subr.bf16.mxu0 0
    %1385 = vmatpush1.bf16.msra.mxu0 0
    %1386 = vmatprep.subr.bf16.mxu0 0
    %1387 = vmatpush1.bf16.msra.mxu0 0
    %1388 = vmatprep.mubr.bf16.mxu0 0
    %1389 = vmatmul.mubr.bf16.gmra.mrb[0].mxu0 %v1306
    %v1390 = vpop.f32.mrb[0].mxu0
    %v1391 = vadd.f32 %v1295, %v1390
    %v1392 = vpop.f32.mrb[0].mxu0
    %v1393 = vpop.f32.mrb[0].mxu0
    %v1394 = vadd.f32 %v1298, %v1393
    %v1395 = vpop.f32.mrb[0].mxu0
    %1396 = vdwg.mxu0
    %v1397 = vld [vmem:[#allocation2] sm:$0xe0]
    %v1398 = vld [vmem:[#allocation2 + $0x8] sm:$0x1f]
    %s1399 = scalar_lea.vmem [#allocation8], 128
    %v1400 = vld [vmem:[%s1399] sm:$0xf]
    %v1401 = vld [vmem:[%s1399 + $0x4] sm:$0xf]
    %v1402 = vld [vmem:[%s1399 + $0x8] sm:$0xf]
    %v1403 = vld [vmem:[%s1399 + $0xc] sm:$0xf]
    %v1404 = vld [vmem:[%s1399 + $0x10] sm:$0xf]
    %v1405 = vld [vmem:[%s1399 + $0x14] sm:$0xf]
    %v1406 = vld [vmem:[%s1399 + $0x18] sm:$0xf]
    %v1407 = vld [vmem:[%s1399 + $0x1c] sm:$0xf]
    %v1408 = vld [vmem:[%s1399 + $0x20] sm:$0xf]
    %v1409 = vld [vmem:[%s1399 + $0x24] sm:$0xf]
    %v1410 = vld [vmem:[%s1399 + $0x28] sm:$0xf]
    %v1411 = vld [vmem:[%s1399 + $0x2c] sm:$0xf]
    %v1412 = vld [vmem:[%s1399 + $0x30] sm:$0xf]
    %v1413 = vld [vmem:[%s1399 + $0x34] sm:$0xf]
    %v1414 = vld [vmem:[%s1399 + $0x38] sm:$0xf]
    %v1415 = vld [vmem:[%s1399 + $0x3c] sm:$0xf]
    %v1418 = vrot.slane %v1397, 5
    %v1419 = vrot.slane %v1398, 5
    %v1420 = vsel %vm837, %v1418, %v1419
    %v1438 = vunpack.c.l.b16 %v1400
    %v1439 = vunpack.c.l.b16 %v1401
    %v1440 = vunpack.c.l.b16 %v1402
    %v1441 = vunpack.c.l.b16 %v1403
    %v1442 = vunpack.c.l.b16 %v1404
    %v1443 = vunpack.c.l.b16 %v1405
    %v1444 = vunpack.c.l.b16 %v1406
    %v1445 = vunpack.c.l.b16 %v1407
    %v1446 = vunpack.c.l.b16 %v1408
    %v1447 = vunpack.c.l.b16 %v1409
    %v1448 = vunpack.c.l.b16 %v1410
    %v1449 = vunpack.c.l.b16 %v1411
    %v1450 = vunpack.c.l.b16 %v1412
    %v1451 = vunpack.c.l.b16 %v1413
    %v1452 = vunpack.c.l.b16 %v1414
    %v1453 = vunpack.c.l.b16 %v1415
    %v1454 = vpack.c.b16 %v1439, %v1438
    %v1455 = vpack.c.b16 %v1441, %v1440
    %v1456 = vpack.c.b16 %v1443, %v1442
    %v1457 = vpack.c.b16 %v1445, %v1444
    %v1458 = vpack.c.b16 %v1447, %v1446
    %v1459 = vpack.c.b16 %v1449, %v1448
    %v1460 = vpack.c.b16 %v1451, %v1450
    %v1461 = vpack.c.b16 %v1453, %v1452
    %1470 = vmatprep.subr.bf16.mxu0 0
    %1471 = vmatpush1.bf16.msra.mxu0 %v1454
    %1472 = vmatprep.subr.bf16.mxu0 0
    %1473 = vmatpush1.bf16.msra.mxu0 %v1455
    %1474 = vmatprep.subr.bf16.mxu0 0
    %1475 = vmatpush1.bf16.msra.mxu0 %v1456
    %1476 = vmatprep.subr.bf16.mxu0 0
    %1477 = vmatpush1.bf16.msra.mxu0 %v1457
    %1478 = vmatprep.subr.bf16.mxu0 0
    %1479 = vmatpush1.bf16.msra.mxu0 %v1458
    %1480 = vmatprep.subr.bf16.mxu0 0
    %1481 = vmatpush1.bf16.msra.mxu0 %v1459
    %1482 = vmatprep.subr.bf16.mxu0 0
    %1483 = vmatpush1.bf16.msra.mxu0 %v1460
    %1484 = vmatprep.subr.bf16.mxu0 0
    %1485 = vmatpush1.bf16.msra.mxu0 %v1461
    %1486 = vmatprep.subr.bf16.mxu0 0
    %1487 = vmatpush1.bf16.msra.mxu0 0
    %1488 = vmatprep.subr.bf16.mxu0 0
    %1489 = vmatpush1.bf16.msra.mxu0 0
    %1490 = vmatprep.subr.bf16.mxu0 0
    %1491 = vmatpush1.bf16.msra.mxu0 0
    %1492 = vmatprep.subr.bf16.mxu0 0
    %1493 = vmatpush1.bf16.msra.mxu0 0
    %1494 = vmatprep.subr.bf16.mxu0 0
    %1495 = vmatpush1.bf16.msra.mxu0 0
    %1496 = vmatprep.subr.bf16.mxu0 0
    %1497 = vmatpush1.bf16.msra.mxu0 0
    %1498 = vmatprep.subr.bf16.mxu0 0
    %1499 = vmatpush1.bf16.msra.mxu0 0
    %1500 = vmatprep.subr.bf16.mxu0 0
    %1501 = vmatpush1.bf16.msra.mxu0 0
    %1502 = vmatprep.mubr.bf16.mxu0 0
    %1503 = vmatmul.mubr.bf16.gmra.mrb[0].mxu0 %v1420
    %v1504 = vpop.f32.mrb[0].mxu0
    %v1505 = vadd.f32 0.0, %v1504
    %v1506 = vpop.f32.mrb[0].mxu0
    %v1507 = vpop.f32.mrb[0].mxu0
    %v1508 = vadd.f32 0.0, %v1507
    %v1509 = vpop.f32.mrb[0].mxu0
    %1510 = vdwg.mxu0
    %v1511 = vadd.f32 %v1391, %v1505
    %v1512 = vadd.f32 %v1394, %v1508
    %v1513 = vld [vmem:[%s8] sm:$0x1]
    %v1514 = vld [vmem:[%s9] sm:$0x1]
    %v1515 = vadd.f32 %v1511, %v1512
    %v1516 = vrot.slane %v1515, 4
    %v1517 = vadd.f32 %v1515, %v1516
    %v1518 = vrot.slane %v1517, 2
    %v1519 = vadd.f32 %v1517, %v1518
    %v1520 = vrot.slane %v1519, 1
    %v1521 = vadd.f32 %v1519, %v1520
    %v1522 = vmul.f32 %v1521, 0.0625
    %v1523 = vsub.f32 %v1511, %v1522
    %v1524 = vsub.f32 %v1512, %v1522
    %v1525 = vmul.f32 %v1523, %v1523
    %v1526 = vmul.f32 %v1524, %v1524
    %v1527 = vadd.f32 %v1525, %v1526
    %v1528 = vrot.slane %v1527, 4
    %v1529 = vadd.f32 %v1527, %v1528
    %v1530 = vrot.slane %v1529, 2
    %v1531 = vadd.f32 %v1529, %v1530
    %v1532 = vrot.slane %v1531, 1
    %v1533 = vadd.f32 %v1531, %v1532
    %v1534 = vmul.f32 %v1533, 0.0625
    %v1535 = vadd.f32 %v1534, 1e-05
    %v1536 = vrsqrt.pop %v1535
    %v1537 = vmul.f32 %v1536, %v1513
    %v1538 = vmul.f32 %v1522, %v1537
    %v1539 = vsub.f32 %v1514, %v1538
    %v1540 = vlaneseq
    %v1541 = vshrl.u32 %v1540, 7
    %v1542 = vsub.s32 0, %v1541
    %v1543 = vrot.slane %v1537, %v1542
    %v1544 = vmul.f32 %v1511, %v1543
    %v1545 = vmul.f32 %v1512, %v1543
    %v1547 = vlaneseq
    %v1548 = vshrl.u32 %v1547, 7
    %v1549 = vsub.s32 0, %v1548
    %v1550 = vrot.slane %v1539, %v1549
    %v1552 = vadd.f32 %v1544, %v1550
    %v1553 = vadd.f32 %v1545, %v1550
    %v1554 = vmax.f32 %v1552, 0.0
    %v1555 = vmax.f32 %v1553, 0.0
    %v1556 = vpack.c.bf16 %v1555, %v1554
    %v1558 = vrot.slane %v1556, 4
    %1560 = vst [vmem:[#allocation3] sm:$0xf0] %v1558
    %1561 = vst [vmem:[#allocation3 + $0x8] sm:$0xf] %v1558
    %v1562 = vld [vmem:[#allocation3] sm:$0xf0]
    %v1563 = vld [vmem:[#allocation3 + $0x8] sm:$0xf]
    %v1564 = vld [vmem:[#allocation3] sm:$0xf8]
    %v1565 = vld [vmem:[#allocation3 + $0x8] sm:$0x7]
    %v1566 = vld [vmem:[#allocation3] sm:$0xe0]
    %v1567 = vld [vmem:[#allocation3 + $0x8] sm:$0x1f]
    %s1568 = scalar_lea.vmem [#allocation9], 64
    %v1569 = vld [vmem:[%s1568] sm:$0xf]
    %v1570 = vld [vmem:[%s1568 + $0x4] sm:$0xf]
    %v1571 = vld [vmem:[%s1568 + $0x8] sm:$0xf]
    %v1572 = vld [vmem:[%s1568 + $0xc] sm:$0xf]
    %v1573 = vld [vmem:[%s1568 + $0x10] sm:$0xf]
    %v1574 = vld [vmem:[%s1568 + $0x14] sm:$0xf]
    %v1575 = vld [vmem:[%s1568 + $0x18] sm:$0xf]
    %v1576 = vld [vmem:[%s1568 + $0x1c] sm:$0xf]
    %v1577 = vld [vmem:[%s1568 + $0x20] sm:$0xf]
    %v1578 = vld [vmem:[%s1568 + $0x24] sm:$0xf]
    %v1579 = vld [vmem:[%s1568 + $0x28] sm:$0xf]
    %v1580 = vld [vmem:[%s1568 + $0x2c] sm:$0xf]
    %v1581 = vld [vmem:[%s1568 + $0x30] sm:$0xf]
    %v1582 = vld [vmem:[%s1568 + $0x34] sm:$0xf]
    %v1583 = vld [vmem:[%s1568 + $0x38] sm:$0xf]
    %v1584 = vld [vmem:[%s1568 + $0x3c] sm:$0xf]
    %s1585 = scalar_lea.vmem [#allocation9], 192
    %v1586 = vld [vmem:[%s1585] sm:$0xf]
    %v1587 = vld [vmem:[%s1585 + $0x4] sm:$0xf]
    %v1588 = vld [vmem:[%s1585 + $0x8] sm:$0xf]
    %v1589 = vld [vmem:[%s1585 + $0xc] sm:$0xf]
    %v1590 = vld [vmem:[%s1585 + $0x10] sm:$0xf]
    %v1591 = vld [vmem:[%s1585 + $0x14] sm:$0xf]
    %v1592 = vld [vmem:[%s1585 + $0x18] sm:$0xf]
    %v1593 = vld [vmem:[%s1585 + $0x1c] sm:$0xf]
    %v1594 = vld [vmem:[%s1585 + $0x20] sm:$0xf]
    %v1595 = vld [vmem:[%s1585 + $0x24] sm:$0xf]
    %v1596 = vld [vmem:[%s1585 + $0x28] sm:$0xf]
    %v1597 = vld [vmem:[%s1585 + $0x2c] sm:$0xf]
    %v1598 = vld [vmem:[%s1585 + $0x30] sm:$0xf]
    %v1599 = vld [vmem:[%s1585 + $0x34] sm:$0xf]
    %v1600 = vld [vmem:[%s1585 + $0x38] sm:$0xf]
    %v1601 = vld [vmem:[%s1585 + $0x3c] sm:$0xf]
    %v1604 = vrot.slane %v1564, 3
    %v1605 = vrot.slane %v1565, 3
    %v1606 = vsel %vm1303, %v1604, %v1605
    %v1624 = vunpack.c.l.b16 %v1586
    %v1625 = vunpack.c.l.b16 %v1587
    %v1626 = vunpack.c.l.b16 %v1588
    %v1627 = vunpack.c.l.b16 %v1589
    %v1628 = vunpack.c.l.b16 %v1590
    %v1629 = vunpack.c.l.b16 %v1591
    %v1630 = vunpack.c.l.b16 %v1592
    %v1631 = vunpack.c.l.b16 %v1593
    %v1632 = vunpack.c.l.b16 %v1594
    %v1633 = vunpack.c.l.b16 %v1595
    %v1634 = vunpack.c.l.b16 %v1596
    %v1635 = vunpack.c.l.b16 %v1597
    %v1636 = vunpack.c.l.b16 %v1598
    %v1637 = vunpack.c.l.b16 %v1599
    %v1638 = vunpack.c.l.b16 %v1600
    %v1639 = vunpack.c.l.b16 %v1601
    %v1640 = vpack.c.b16 %v1625, %v1624
    %v1641 = vpack.c.b16 %v1627, %v1626
    %v1642 = vpack.c.b16 %v1629, %v1628
    %v1643 = vpack.c.b16 %v1631, %v1630
    %v1644 = vpack.c.b16 %v1633, %v1632
    %v1645 = vpack.c.b16 %v1635, %v1634
    %v1646 = vpack.c.b16 %v1637, %v1636
    %v1647 = vpack.c.b16 %v1639, %v1638
    %1656 = vmatprep.subr.bf16.mxu0 0
    %1657 = vmatpush1.bf16.msra.mxu0 %v1640
    %1658 = vmatprep.subr.bf16.mxu0 0
    %1659 = vmatpush1.bf16.msra.mxu0 %v1641
    %1660 = vmatprep.subr.bf16.mxu0 0
    %1661 = vmatpush1.bf16.msra.mxu0 %v1642
    %1662 = vmatprep.subr.bf16.mxu0 0
    %1663 = vmatpush1.bf16.msra.mxu0 %v1643
    %1664 = vmatprep.subr.bf16.mxu0 0
    %1665 = vmatpush1.bf16.msra.mxu0 %v1644
    %1666 = vmatprep.subr.bf16.mxu0 0
    %1667 = vmatpush1.bf16.msra.mxu0 %v1645
    %1668 = vmatprep.subr.bf16.mxu0 0
    %1669 = vmatpush1.bf16.msra.mxu0 %v1646
    %1670 = vmatprep.subr.bf16.mxu0 0
    %1671 = vmatpush1.bf16.msra.mxu0 %v1647
    %1672 = vmatprep.subr.bf16.mxu0 0
    %1673 = vmatpush1.bf16.msra.mxu0 0
    %1674 = vmatprep.subr.bf16.mxu0 0
    %1675 = vmatpush1.bf16.msra.mxu0 0
    %1676 = vmatprep.subr.bf16.mxu0 0
    %1677 = vmatpush1.bf16.msra.mxu0 0
    %1678 = vmatprep.subr.bf16.mxu0 0
    %1679 = vmatpush1.bf16.msra.mxu0 0
    %1680 = vmatprep.subr.bf16.mxu0 0
    %1681 = vmatpush1.bf16.msra.mxu0 0
    %1682 = vmatprep.subr.bf16.mxu0 0
    %1683 = vmatpush1.bf16.msra.mxu0 0
    %1684 = vmatprep.subr.bf16.mxu0 0
    %1685 = vmatpush1.bf16.msra.mxu0 0
    %1686 = vmatprep.subr.bf16.mxu0 0
    %1687 = vmatpush1.bf16.msra.mxu0 0
    %1688 = vmatprep.mubr.bf16.mxu0 0
    %1689 = vmatmul.mubr.bf16.gmra.mrb[0].mxu0 %v1606
    %v1690 = vpop.f32.mrb[0].mxu0
    %v1691 = vadd.f32 0.0, %v1690
    %v1692 = vpop.f32.mrb[0].mxu0
    %v1693 = vpop.f32.mrb[0].mxu0
    %v1694 = vadd.f32 0.0, %v1693
    %v1695 = vpop.f32.mrb[0].mxu0
    %1696 = vdwg.mxu0
    %v1699 = vrot.slane %v1562, 4
    %v1700 = vrot.slane %v1563, 4
    %v1701 = vsel %vm1207, %v1699, %v1700
    %v1719 = vunpack.c.l.b16 %v1569
    %v1720 = vunpack.c.l.b16 %v1570
    %v1721 = vunpack.c.l.b16 %v1571
    %v1722 = vunpack.c.l.b16 %v1572
    %v1723 = vunpack.c.l.b16 %v1573
    %v1724 = vunpack.c.l.b16 %v1574
    %v1725 = vunpack.c.l.b16 %v1575
    %v1726 = vunpack.c.l.b16 %v1576
    %v1727 = vunpack.c.l.b16 %v1577
    %v1728 = vunpack.c.l.b16 %v1578
    %v1729 = vunpack.c.l.b16 %v1579
    %v1730 = vunpack.c.l.b16 %v1580
    %v1731 = vunpack.c.l.b16 %v1581
    %v1732 = vunpack.c.l.b16 %v1582
    %v1733 = vunpack.c.l.b16 %v1583
    %v1734 = vunpack.c.l.b16 %v1584
    %v1735 = vpack.c.b16 %v1720, %v1719
    %v1736 = vpack.c.b16 %v1722, %v1721
    %v1737 = vpack.c.b16 %v1724, %v1723
    %v1738 = vpack.c.b16 %v1726, %v1725
    %v1739 = vpack.c.b16 %v1728, %v1727
    %v1740 = vpack.c.b16 %v1730, %v1729
    %v1741 = vpack.c.b16 %v1732, %v1731
    %v1742 = vpack.c.b16 %v1734, %v1733
    %1751 = vmatprep.subr.bf16.mxu0 0
    %1752 = vmatpush1.bf16.msra.mxu0 %v1735
    %1753 = vmatprep.subr.bf16.mxu0 0
    %1754 = vmatpush1.bf16.msra.mxu0 %v1736
    %1755 = vmatprep.subr.bf16.mxu0 0
    %1756 = vmatpush1.bf16.msra.mxu0 %v1737
    %1757 = vmatprep.subr.bf16.mxu0 0
    %1758 = vmatpush1.bf16.msra.mxu0 %v1738
    %1759 = vmatprep.subr.bf16.mxu0 0
    %1760 = vmatpush1.bf16.msra.mxu0 %v1739
    %1761 = vmatprep.subr.bf16.mxu0 0
    %1762 = vmatpush1.bf16.msra.mxu0 %v1740
    %1763 = vmatprep.subr.bf16.mxu0 0
    %1764 = vmatpush1.bf16.msra.mxu0 %v1741
    %1765 = vmatprep.subr.bf16.mxu0 0
    %1766 = vmatpush1.bf16.msra.mxu0 %v1742
    %1767 = vmatprep.subr.bf16.mxu0 0
    %1768 = vmatpush1.bf16.msra.mxu0 0
    %1769 = vmatprep.subr.bf16.mxu0 0
    %1770 = vmatpush1.bf16.msra.mxu0 0
    %1771 = vmatprep.subr.bf16.mxu0 0
    %1772 = vmatpush1.bf16.msra.mxu0 0
    %1773 = vmatprep.subr.bf16.mxu0 0
    %1774 = vmatpush1.bf16.msra.mxu0 0
    %1775 = vmatprep.subr.bf16.mxu0 0
    %1776 = vmatpush1.bf16.msra.mxu0 0
    %1777 = vmatprep.subr.bf16.mxu0 0
    %1778 = vmatpush1.bf16.msra.mxu0 0
    %1779 = vmatprep.subr.bf16.mxu0 0
    %1780 = vmatpush1.bf16.msra.mxu0 0
    %1781 = vmatprep.subr.bf16.mxu0 0
    %1782 = vmatpush1.bf16.msra.mxu0 0
    %1783 = vmatprep.mubr.bf16.mxu0 0
    %1784 = vmatmul.mubr.bf16.gmra.mrb[0].mxu0 %v1701
    %v1785 = vpop.f32.mrb[0].mxu0
    %v1786 = vadd.f32 %v1691, %v1785
    %v1787 = vpop.f32.mrb[0].mxu0
    %v1788 = vpop.f32.mrb[0].mxu0
    %v1789 = vadd.f32 %v1694, %v1788
    %v1790 = vpop.f32.mrb[0].mxu0
    %1791 = vdwg.mxu0
    %s1792 = scalar_lea.vmem [#allocation9], 128
    %v1793 = vld [vmem:[%s1792] sm:$0xf]
    %v1794 = vld [vmem:[%s1792 + $0x4] sm:$0xf]
    %v1795 = vld [vmem:[%s1792 + $0x8] sm:$0xf]
    %v1796 = vld [vmem:[%s1792 + $0xc] sm:$0xf]
    %v1797 = vld [vmem:[%s1792 + $0x10] sm:$0xf]
    %v1798 = vld [vmem:[%s1792 + $0x14] sm:$0xf]
    %v1799 = vld [vmem:[%s1792 + $0x18] sm:$0xf]
    %v1800 = vld [vmem:[%s1792 + $0x1c] sm:$0xf]
    %v1801 = vld [vmem:[%s1792 + $0x20] sm:$0xf]
    %v1802 = vld [vmem:[%s1792 + $0x24] sm:$0xf]
    %v1803 = vld [vmem:[%s1792 + $0x28] sm:$0xf]
    %v1804 = vld [vmem:[%s1792 + $0x2c] sm:$0xf]
    %v1805 = vld [vmem:[%s1792 + $0x30] sm:$0xf]
    %v1806 = vld [vmem:[%s1792 + $0x34] sm:$0xf]
    %v1807 = vld [vmem:[%s1792 + $0x38] sm:$0xf]
    %v1808 = vld [vmem:[%s1792 + $0x3c] sm:$0xf]
    %v1809 = vld [vmem:[#allocation9] sm:$0xf]
    %v1810 = vld [vmem:[#allocation9 + $0x4] sm:$0xf]
    %v1811 = vld [vmem:[#allocation9 + $0x8] sm:$0xf]
    %v1812 = vld [vmem:[#allocation9 + $0xc] sm:$0xf]
    %v1813 = vld [vmem:[#allocation9 + $0x10] sm:$0xf]
    %v1814 = vld [vmem:[#allocation9 + $0x14] sm:$0xf]
    %v1815 = vld [vmem:[#allocation9 + $0x18] sm:$0xf]
    %v1816 = vld [vmem:[#allocation9 + $0x1c] sm:$0xf]
    %v1817 = vld [vmem:[#allocation9 + $0x20] sm:$0xf]
    %v1818 = vld [vmem:[#allocation9 + $0x24] sm:$0xf]
    %v1819 = vld [vmem:[#allocation9 + $0x28] sm:$0xf]
    %v1820 = vld [vmem:[#allocation9 + $0x2c] sm:$0xf]
    %v1821 = vld [vmem:[#allocation9 + $0x30] sm:$0xf]
    %v1822 = vld [vmem:[#allocation9 + $0x34] sm:$0xf]
    %v1823 = vld [vmem:[#allocation9 + $0x38] sm:$0xf]
    %v1824 = vld [vmem:[#allocation9 + $0x3c] sm:$0xf]
    %v1827 = vrot.slane %v1566, 5
    %v1828 = vrot.slane %v1567, 5
    %v1829 = vsel %vm837, %v1827, %v1828
    %v1847 = vunpack.c.l.b16 %v1809
    %v1848 = vunpack.c.l.b16 %v1810
    %v1849 = vunpack.c.l.b16 %v1811
    %v1850 = vunpack.c.l.b16 %v1812
    %v1851 = vunpack.c.l.b16 %v1813
    %v1852 = vunpack.c.l.b16 %v1814
    %v1853 = vunpack.c.l.b16 %v1815
    %v1854 = vunpack.c.l.b16 %v1816
    %v1855 = vunpack.c.l.b16 %v1817
    %v1856 = vunpack.c.l.b16 %v1818
    %v1857 = vunpack.c.l.b16 %v1819
    %v1858 = vunpack.c.l.b16 %v1820
    %v1859 = vunpack.c.l.b16 %v1821
    %v1860 = vunpack.c.l.b16 %v1822
    %v1861 = vunpack.c.l.b16 %v1823
    %v1862 = vunpack.c.l.b16 %v1824
    %v1863 = vpack.c.b16 %v1848, %v1847
    %v1864 = vpack.c.b16 %v1850, %v1849
    %v1865 = vpack.c.b16 %v1852, %v1851
    %v1866 = vpack.c.b16 %v1854, %v1853
    %v1867 = vpack.c.b16 %v1856, %v1855
    %v1868 = vpack.c.b16 %v1858, %v1857
    %v1869 = vpack.c.b16 %v1860, %v1859
    %v1870 = vpack.c.b16 %v1862, %v1861
    %1879 = vmatprep.subr.bf16.mxu0 0
    %1880 = vmatpush1.bf16.msra.mxu0 %v1863
    %1881 = vmatprep.subr.bf16.mxu0 0
    %1882 = vmatpush1.bf16.msra.mxu0 %v1864
    %1883 = vmatprep.subr.bf16.mxu0 0
    %1884 = vmatpush1.bf16.msra.mxu0 %v1865
    %1885 = vmatprep.subr.bf16.mxu0 0
    %1886 = vmatpush1.bf16.msra.mxu0 %v1866
    %1887 = vmatprep.subr.bf16.mxu0 0
    %1888 = vmatpush1.bf16.msra.mxu0 %v1867
    %1889 = vmatprep.subr.bf16.mxu0 0
    %1890 = vmatpush1.bf16.msra.mxu0 %v1868
    %1891 = vmatprep.subr.bf16.mxu0 0
    %1892 = vmatpush1.bf16.msra.mxu0 %v1869
    %1893 = vmatprep.subr.bf16.mxu0 0
    %1894 = vmatpush1.bf16.msra.mxu0 %v1870
    %1895 = vmatprep.subr.bf16.mxu0 0
    %1896 = vmatpush1.bf16.msra.mxu0 0
    %1897 = vmatprep.subr.bf16.mxu0 0
    %1898 = vmatpush1.bf16.msra.mxu0 0
    %1899 = vmatprep.subr.bf16.mxu0 0
    %1900 = vmatpush1.bf16.msra.mxu0 0
    %1901 = vmatprep.subr.bf16.mxu0 0
    %1902 = vmatpush1.bf16.msra.mxu0 0
    %1903 = vmatprep.subr.bf16.mxu0 0
    %1904 = vmatpush1.bf16.msra.mxu0 0
    %1905 = vmatprep.subr.bf16.mxu0 0
    %1906 = vmatpush1.bf16.msra.mxu0 0
    %1907 = vmatprep.subr.bf16.mxu0 0
    %1908 = vmatpush1.bf16.msra.mxu0 0
    %1909 = vmatprep.subr.bf16.mxu0 0
    %1910 = vmatpush1.bf16.msra.mxu0 0
    %1911 = vmatprep.mubr.bf16.mxu0 0
    %1912 = vmatmul.mubr.bf16.gmra.mrb[0].mxu0 %v1829
    %v1913 = vpop.f32.mrb[0].mxu0
    %v1914 = vadd.f32 0.0, %v1913
    %v1915 = vpop.f32.mrb[0].mxu0
    %v1916 = vpop.f32.mrb[0].mxu0
    %v1917 = vadd.f32 0.0, %v1916
    %v1918 = vpop.f32.mrb[0].mxu0
    %1919 = vdwg.mxu0
    %v1936 = vunpack.c.l.b16 %v1793
    %v1937 = vunpack.c.l.b16 %v1794
    %v1938 = vunpack.c.l.b16 %v1795
    %v1939 = vunpack.c.l.b16 %v1796
    %v1940 = vunpack.c.l.b16 %v1797
    %v1941 = vunpack.c.l.b16 %v1798
    %v1942 = vunpack.c.l.b16 %v1799
    %v1943 = vunpack.c.l.b16 %v1800
    %v1944 = vunpack.c.l.b16 %v1801
    %v1945 = vunpack.c.l.b16 %v1802
    %v1946 = vunpack.c.l.b16 %v1803
    %v1947 = vunpack.c.l.b16 %v1804
    %v1948 = vunpack.c.l.b16 %v1805
    %v1949 = vunpack.c.l.b16 %v1806
    %v1950 = vunpack.c.l.b16 %v1807
    %v1951 = vunpack.c.l.b16 %v1808
    %v1952 = vpack.c.b16 %v1937, %v1936
    %v1953 = vpack.c.b16 %v1939, %v1938
    %v1954 = vpack.c.b16 %v1941, %v1940
    %v1955 = vpack.c.b16 %v1943, %v1942
    %v1956 = vpack.c.b16 %v1945, %v1944
    %v1957 = vpack.c.b16 %v1947, %v1946
    %v1958 = vpack.c.b16 %v1949, %v1948
    %v1959 = vpack.c.b16 %v1951, %v1950
    %1968 = vmatprep.subr.bf16.mxu0 0
    %1969 = vmatpush1.bf16.msra.mxu0 %v1952
    %1970 = vmatprep.subr.bf16.mxu0 0
    %1971 = vmatpush1.bf16.msra.mxu0 %v1953
    %1972 = vmatprep.subr.bf16.mxu0 0
    %1973 = vmatpush1.bf16.msra.mxu0 %v1954
    %1974 = vmatprep.subr.bf16.mxu0 0
    %1975 = vmatpush1.bf16.msra.mxu0 %v1955
    %1976 = vmatprep.subr.bf16.mxu0 0
    %1977 = vmatpush1.bf16.msra.mxu0 %v1956
    %1978 = vmatprep.subr.bf16.mxu0 0
    %1979 = vmatpush1.bf16.msra.mxu0 %v1957
    %1980 = vmatprep.subr.bf16.mxu0 0
    %1981 = vmatpush1.bf16.msra.mxu0 %v1958
    %1982 = vmatprep.subr.bf16.mxu0 0
    %1983 = vmatpush1.bf16.msra.mxu0 %v1959
    %1984 = vmatprep.subr.bf16.mxu0 0
    %1985 = vmatpush1.bf16.msra.mxu0 0
    %1986 = vmatprep.subr.bf16.mxu0 0
    %1987 = vmatpush1.bf16.msra.mxu0 0
    %1988 = vmatprep.subr.bf16.mxu0 0
    %1989 = vmatpush1.bf16.msra.mxu0 0
    %1990 = vmatprep.subr.bf16.mxu0 0
    %1991 = vmatpush1.bf16.msra.mxu0 0
    %1992 = vmatprep.subr.bf16.mxu0 0
    %1993 = vmatpush1.bf16.msra.mxu0 0
    %1994 = vmatprep.subr.bf16.mxu0 0
    %1995 = vmatpush1.bf16.msra.mxu0 0
    %1996 = vmatprep.subr.bf16.mxu0 0
    %1997 = vmatpush1.bf16.msra.mxu0 0
    %1998 = vmatprep.subr.bf16.mxu0 0
    %1999 = vmatpush1.bf16.msra.mxu0 0
    %2000 = vmatprep.mubr.bf16.mxu0 0
    %2001 = vmatmul.mubr.bf16.gmra.mrb[0].mxu0 %v1701
    %v2002 = vpop.f32.mrb[0].mxu0
    %v2003 = vadd.f32 %v1914, %v2002
    %v2004 = vpop.f32.mrb[0].mxu0
    %v2005 = vpop.f32.mrb[0].mxu0
    %v2006 = vadd.f32 %v1917, %v2005
    %v2007 = vpop.f32.mrb[0].mxu0
    %2008 = vdwg.mxu0
    %v2009 = vtanh.pop %v1786
    %v2010 = vtanh.pop %v1789
    %v2011 = vtanh.pop %v2003
    %v2012 = vtanh.pop %v2006
    %v2015 = vcombine.high %v2009, %v2009
    %v2017 = vunpack.c.l.s4 1983009808
    %v2018 = vunpack.c.0.s8 %v2017
    %v2019 = vlaneseq
    %v2020 = vshrl.u32 %v2019, 7
    %v2021 = vsub.s32 %v2018, %v2020
    %v2022 = vrot.slane %v2009, %v2021
    %v2024 = vunpack.c.l.s4 1983009808
    %v2025 = vunpack.c.0.s8 %v2024
    %v2026 = vlaneseq
    %v2027 = vshrl.u32 %v2026, 7
    %v2028 = vsub.s32 %v2025, %v2027
    %v2029 = vrot.slane %v2015, %v2028
    %v2030 = vcombine.high %v2022, %v2022
    %v2031 = vcombine.high %v2029, %v2029
    %v2032 = vcombine.high %v2010, %v2010
    %v2034 = vunpack.c.l.s4 1983009808
    %v2035 = vunpack.c.0.s8 %v2034
    %v2036 = vlaneseq
    %v2037 = vshrl.u32 %v2036, 7
    %v2038 = vsub.s32 %v2035, %v2037
    %v2039 = vrot.slane %v2010, %v2038
    %v2041 = vunpack.c.l.s4 1983009808
    %v2042 = vunpack.c.0.s8 %v2041
    %v2043 = vlaneseq
    %v2044 = vshrl.u32 %v2043, 7
    %v2045 = vsub.s32 %v2042, %v2044
    %v2046 = vrot.slane %v2032, %v2045
    %v2047 = vcombine.high %v2039, %v2039
    %v2048 = vcombine.high %v2046, %v2046
    %v2059 = vcombine.high %v2011, %v2011
    %v2061 = vunpack.c.l.s4 1983009808
    %v2062 = vunpack.c.0.s8 %v2061
    %v2063 = vlaneseq
    %v2064 = vshrl.u32 %v2063, 7
    %v2065 = vsub.s32 %v2062, %v2064
    %v2066 = vrot.slane %v2011, %v2065
    %v2068 = vunpack.c.l.s4 1983009808
    %v2069 = vunpack.c.0.s8 %v2068
    %v2070 = vlaneseq
    %v2071 = vshrl.u32 %v2070, 7
    %v2072 = vsub.s32 %v2069, %v2071
    %v2073 = vrot.slane %v2059, %v2072
    %v2074 = vcombine.high %v2066, %v2066
    %v2075 = vcombine.high %v2073, %v2073
    %v2076 = vcombine.high %v2012, %v2012
    %v2078 = vunpack.c.l.s4 1983009808
    %v2079 = vunpack.c.0.s8 %v2078
    %v2080 = vlaneseq
    %v2081 = vshrl.u32 %v2080, 7
    %v2082 = vsub.s32 %v2079, %v2081
    %v2083 = vrot.slane %v2012, %v2082
    %v2085 = vunpack.c.l.s4 1983009808
    %v2086 = vunpack.c.0.s8 %v2085
    %v2087 = vlaneseq
    %v2088 = vshrl.u32 %v2087, 7
    %v2089 = vsub.s32 %v2086, %v2088
    %v2090 = vrot.slane %v2076, %v2089
    %v2091 = vcombine.high %v2083, %v2083
    %v2092 = vcombine.high %v2090, %v2090
    %v2093 = vcombine.low %v2066, %v2066
    %v2095 = vunpack.c.l.s4 1983009808
    %v2096 = vunpack.c.0.s8 %v2095
    %v2097 = vlaneseq
    %v2098 = vshrl.u32 %v2097, 7
    %v2099 = vsub.s32 %v2096, %v2098
    %v2100 = vrot.slane %v2093, %v2099
    %v2101 = vcombine.low %v2074, %v2074
    %v2103 = vunpack.c.l.s4 1983009808
    %v2104 = vunpack.c.0.s8 %v2103
    %v2105 = vlaneseq
    %v2106 = vshrl.u32 %v2105, 7
    %v2107 = vsub.s32 %v2104, %v2106
    %v2108 = vrot.slane %v2101, %v2107
    %v2109 = vcombine.low %v2073, %v2073
    %v2111 = vunpack.c.l.s4 1983009808
    %v2112 = vunpack.c.0.s8 %v2111
    %v2113 = vlaneseq
    %v2114 = vshrl.u32 %v2113, 7
    %v2115 = vsub.s32 %v2112, %v2114
    %v2116 = vrot.slane %v2109, %v2115
    %v2117 = vcombine.low %v2075, %v2075
    %v2119 = vunpack.c.l.s4 1983009808
    %v2120 = vunpack.c.0.s8 %v2119
    %v2121 = vlaneseq
    %v2122 = vshrl.u32 %v2121, 7
    %v2123 = vsub.s32 %v2120, %v2122
    %v2124 = vrot.slane %v2117, %v2123
    %v2125 = vcombine.low %v2083, %v2083
    %v2127 = vunpack.c.l.s4 1983009808
    %v2128 = vunpack.c.0.s8 %v2127
    %v2129 = vlaneseq
    %v2130 = vshrl.u32 %v2129, 7
    %v2131 = vsub.s32 %v2128, %v2130
    %v2132 = vrot.slane %v2125, %v2131
    %v2133 = vcombine.low %v2091, %v2091
    %v2135 = vunpack.c.l.s4 1983009808
    %v2136 = vunpack.c.0.s8 %v2135
    %v2137 = vlaneseq
    %v2138 = vshrl.u32 %v2137, 7
    %v2139 = vsub.s32 %v2136, %v2138
    %v2140 = vrot.slane %v2133, %v2139
    %v2141 = vcombine.low %v2090, %v2090
    %v2143 = vunpack.c.l.s4 1983009808
    %v2144 = vunpack.c.0.s8 %v2143
    %v2145 = vlaneseq
    %v2146 = vshrl.u32 %v2145, 7
    %v2147 = vsub.s32 %v2144, %v2146
    %v2148 = vrot.slane %v2141, %v2147
    %v2149 = vcombine.low %v2092, %v2092
    %v2151 = vunpack.c.l.s4 1983009808
    %v2152 = vunpack.c.0.s8 %v2151
    %v2153 = vlaneseq
    %v2154 = vshrl.u32 %v2153, 7
    %v2155 = vsub.s32 %v2152, %v2154
    %v2156 = vrot.slane %v2149, %v2155
    %v2165 = vsel %vm1149, %v2022, %v2100
    %v2166 = vsel %vm1149, %v2030, %v2108
    %v2167 = vsel %vm1149, %v2029, %v2116
    %v2168 = vsel %vm1149, %v2031, %v2124
    %v2169 = vsel %vm1149, %v2039, %v2132
    %v2170 = vsel %vm1149, %v2047, %v2140
    %v2171 = vsel %vm1149, %v2046, %v2148
    %v2172 = vsel %vm1149, %v2048, %v2156
    %v2181 = vcombine.low %v2165, %v2166
    %v2182 = vcombine.low %v2167, %v2168
    %v2183 = vcombine.low %v2169, %v2170
    %v2184 = vcombine.low %v2171, %v2172
    %2189 = vst [vmem:[%s11] sm:$0xff] %v2181
    %2190 = vst [vmem:[%s11 + $0x8] sm:$0xff] %v2182
    %2191 = vst [vmem:[%s11 + $0x10] sm:$0xff] %v2183
    %2192 = vst [vmem:[%s11 + $0x18] sm:$0xff] %v2184
    // Predicated region
    $region62: #{forward.1} parent=1 // pred_check
      _
    $region63: #{forward.1} parent=1 // pred_check_branch
      %2194 = sbr.rel (0) target = $region65
    $region64: #{forward.1} parent=1 // pred_region
      _
    $region65: #{forward.1} parent=1 // pred_fallthru
      _
    // Predicated region
    $region66: #{forward.1} parent=1 // pred_check
      _
    $region67: #{forward.1} parent=1 // pred_check_branch
      %2196 = sbr.rel (0) target = $region69
    $region68: #{forward.1} parent=1 // pred_region
      _
    $region69: #{forward.1} parent=1 // pred_fallthru
      _
    %2197 = vsyncpa [#allocation5], 1
    %2198 = vsyncpa [#allocation7], 1
    %2199 = vsyncpa [#allocation10], 1

</llo_original>
